<compile_context>
chip_gen: v6e
topology: v6e:2x2x1
jax: 0.10.0
libtpu: 0.0.40
codegen_flags: <defaults>
</compile_context>

<pallas_src>
from functools import partial

import jax
import jax.numpy as jnp
from jax.experimental import pallas as pl
from jax.experimental.pallas import tpu as pltpu

C = 3  # channels per map

# slab row/column layout: f0=0:3, f1=3:6, f2=6:9, est=9:12,
#                         target=12:15, hf0=15:18, hf1=18:21, hf2=21:24
_COL_F0, _COL_F1, _COL_F2, _COL_EST = 0, 3, 6, 9


# ----------------------------------------------------------------------------
# Kernel
# ----------------------------------------------------------------------------
def _vsr_kernel(x_ref, wx_ref, bx_ref, wo_ref, wfd_ref, west_ref, bsr_ref,
                out_ref, loss_ref, *, inv_n1, inv_n2):
    """
    x_ref    : (24, T) bf16   packed input slab tile
    wx_ref   : (40, 24) f32   fused slab weight (rows 33:40 = alignment pad)
    bx_ref   : (40, 1)  f32
    wo_ref   : (15, 3)  f32   phase-2 out1-dependent halves
    wfd_ref  : (3, 12)  f32   SR weight over [flow01, flow12, depth01, depth12]
    west_ref : (3, 3)   f32   SR weight over the (masked) estimated image
    bsr_ref  : (3, 1)   f32
    out_ref  : (3, T)   f32   second-pass SR output tile
    loss_ref : (8, 128) f32   per-tile loss partial (scalar at [0,0])
    """
    xf = x_ref[...].astype(jnp.float32)                              # (24, T)

    # One aligned MXU matmul for every slab-dependent linear map.
    yx = jnp.dot(wx_ref[...], xf, preferred_element_type=jnp.float32) + bx_ref[...]

    wfd, wo, west, bsr = wfd_ref[...], wo_ref[...], west_ref[...], bsr_ref[...]

    def mix(w, v):
        # tiny (R,K)x(K,T) channel mix on the VPU (K in {3, 12}); avoids
        # concat temps and oddly-shaped MXU dispatches.
        acc = w[:, 0:1] * v[0:1, :]
        for k in range(1, w.shape[1]):
            acc = acc + w[:, k:k + 1] * v[k:k + 1, :]
        return acc

    def fd_nonlin(y):
        # rows 0:6 = flow maps -> tanh (FlowProjectionModule)
        # rows 6:12 = depth maps -> maskprocess (> 0)
        row = jax.lax.broadcasted_iota(jnp.int32, y.shape, 0)
        return jnp.where(row < 6, jnp.tanh(y), (y > 0.0).astype(jnp.float32))

    sr_base = yx[12:15]                       # SR contribution of f0,f1,f2 (shared)

    # ------------------------- phase 1 (torch.no_grad) -----------------------
    fd1 = fd_nonlin(yx[0:12])                                   # flow01,flow12,depth01,depth12
    out1 = sr_base + yx[15:18] + mix(wfd, fd1) + bsr            # yx[15:18] = SR est term

    # ------------------------------ phase 2 ----------------------------------
    y2 = yx[18:33] + mix(wo, out1)            # phase-2 pre-activations (15 rows)
    fd2 = fd_nonlin(y2[0:12])
    vos = y2[12:15]                           # VOSProjectionModule(est, out1)
    masked_est = jnp.where(vos > 0.0, 0.0, out1)   # np.ma.MaskedArray(...).filled(0)
    out2 = sr_base + mix(wfd, fd2) + mix(west, masked_est) + bsr
    out_ref[...] = out2.astype(out_ref.dtype)

    # ------------------- loss (VSR.loss_calculate), f32 ----------------------
    t, o0, o2 = xf[12:15], xf[15:18], xf[21:24]   # target, hf0, hf2
    o1 = out2                                     # high_frames[1] <- out2
    d_sr = jnp.abs(o0 - t)
    e = d_sr * inv_n1                                                   # SR_loss
    e = e + jnp.where(t > 0.0, d_sr + jnp.abs(o1 - t), 0.0) * inv_n2    # obj SR loss
    d_fl = jnp.abs(o1 - o0) + jnp.abs(o2 - o1)                          # Flow_loss
    e = e + (d_fl + jnp.where(o0 > 0.0, d_fl, 0.0)) * (0.006 * inv_n2)  # + obj Flow loss
    s = jnp.sum(e)

    pos = (jax.lax.broadcasted_iota(jnp.int32, (8, 128), 0) * 128
           + jax.lax.broadcasted_iota(jnp.int32, (8, 128), 1))
    loss_ref[...] = jnp.where(pos == 0, s, 0.0)


# ----------------------------------------------------------------------------
# Parameters (deterministic, synthetic — no checkpoint loading)
# ----------------------------------------------------------------------------
def init_params(key, c=C):
    ks = jax.random.split(key, 4)

    def w(k, shape):
        return jax.random.normal(k, shape, jnp.float32) * 0.1

    return dict(
        # SRProjectionModule: mixes the 8 stacked 3-channel maps -> 3 channels
        w_sr=w(ks[0], (c, 8 * c)), b_sr=jnp.zeros((c, 1), jnp.float32),
        # FlowProjectionModule: (frame_a, frame_b) -> 3-channel flow-like map
        w_flow=w(ks[1], (c, 2 * c)), b_flow=jnp.zeros((c, 1), jnp.float32),
        # DepthProjectionModule: 2 frames -> 3-channel depth map
        w_depth=w(ks[2], (c, 2 * c)), b_depth=jnp.zeros((c, 1), jnp.float32),
        # VOSProjectionModule: (frame_a, frame_b) -> 3-channel segmentation logits
        w_vos=w(ks[3], (c, 2 * c)), b_vos=jnp.zeros((c, 1), jnp.float32),
    )


def _pack_params(params):
    """Pack the logical weights into the fused kernel operands (dense, no
    per-map channel padding; only the matmul row count is padded 33->40)."""
    Af, Bf = params["w_flow"][:, 0:3], params["w_flow"][:, 3:6]
    Ad, Bd = params["w_depth"][:, 0:3], params["w_depth"][:, 3:6]
    Av, Bv = params["w_vos"][:, 0:3], params["w_vos"][:, 3:6]
    w_sr = params["w_sr"]

    wx = jnp.zeros((40, 24), jnp.float32)

    def put(w, blk, r, c):
        return w.at[r:r + 3, c:c + 3].set(blk)

    # phase-1 flow/depth pre-activations (rows 0:12)
    wx = put(wx, Af, 0, _COL_F0);  wx = put(wx, Bf, 0, _COL_F1)    # flow01  = Flow(f0, f1)
    wx = put(wx, Af, 3, _COL_F1);  wx = put(wx, Bf, 3, _COL_F2)    # flow12  = Flow(f1, f2)
    wx = put(wx, Ad, 6, _COL_F0);  wx = put(wx, Bd, 6, _COL_F1)    # depth01 = Depth(f0, f1)
    wx = put(wx, Ad, 9, _COL_F1);  wx = put(wx, Bd, 9, _COL_F2)    # depth12 = Depth(f1, f2)
    # SR contributions taken straight from the slab (rows 12:18)
    wx = put(wx, w_sr[:, 0:3], 12, _COL_F0)
    wx = put(wx, w_sr[:, 3:6], 12, _COL_F1)
    wx = put(wx, w_sr[:, 6:9], 12, _COL_F2)
    wx = put(wx, w_sr[:, 21:24], 15, _COL_EST)                     # est (phase 1 only)
    # phase-2 slab-dependent halves (rows 18:33); out1 halves live in wo
    wx = put(wx, Af, 18, _COL_EST)                                 # flow01b = Flow(est, out1)
    wx = put(wx, Bf, 21, _COL_F2)                                  # flow12b = Flow(out1, f2)
    wx = put(wx, Ad, 24, _COL_EST)                                 # depth01b
    wx = put(wx, Bd, 27, _COL_F2)                                  # depth12b
    wx = put(wx, Av, 30, _COL_EST)                                 # vos01   = VOS(est, out1)

    z3 = jnp.zeros((3, 1), jnp.float32)
    bx = jnp.concatenate(
        [params["b_flow"], params["b_flow"], params["b_depth"], params["b_depth"],
         z3, z3,
         params["b_flow"], params["b_flow"], params["b_depth"], params["b_depth"],
         params["b_vos"],
         jnp.zeros((7, 1), jnp.float32)], axis=0)                  # (40, 1)

    wo = jnp.concatenate([Bf, Af, Bd, Ad, Bv], axis=0)             # (15, 3)
    wfd = w_sr[:, 9:21]                                            # (3, 12)
    west = w_sr[:, 21:24]                                          # (3, 3)
    return wx, bx, wo, wfd, west, params["b_sr"]


def _pick_tile(p, cap=8192):
    # largest multiple-of-128 divisor of p, capped for v7x's smaller VMEM.
    t = min(cap, p)
    t -= t % 128
    while p % t:
        t -= 128
    return t


# ----------------------------------------------------------------------------
# Forward pass (mirrors VSR.forward + VSR.loss_calculate)
# ----------------------------------------------------------------------------
@partial(jax.jit, static_argnames=("train", "tile_p"))
def vsr_forward(params, data, target, high_frames, estimated_image=None,
                train=True, tile_p=None):
    # data: (T=3, H, W, C=3), target: (1, C, H, W), high_frames: (3, C, H, W)
    T, H, W, Cc = data.shape
    P = H * W
    assert P % 128 == 0  # TODO(synk): lane-pad arbitrary H*W to a 128 multiple
    tile = tile_p if tile_p is not None else _pick_tile(P)
    assert P % tile == 0
    nt = P // tile

    # ---- pack every 3-channel map into ONE dense (24, P) bf16 slab ----------
    data_cp = jnp.transpose(data, (0, 3, 1, 2)).reshape(T * Cc, P)      # f0,f1,f2
    est_cp = (data_cp[0:Cc] if estimated_image is None
              else jnp.transpose(estimated_image, (0, 3, 1, 2)).reshape(Cc, P))
    target_cp = target.reshape(Cc, P)
    hf_cp = high_frames.reshape(T * Cc, P)
    x = jnp.concatenate([data_cp, est_cp, target_cp, hf_cp],
                        axis=0).astype(jnp.bfloat16)                    # (24, P)

    wx, bx, wo, wfd, west, bsr = _pack_params(params)

    def const_spec(arr):  # small weight, resident across all grid steps
        return pl.BlockSpec(arr.shape, lambda i: (0, 0))

    out_cp, loss_parts = pl.pallas_call(
        partial(_vsr_kernel,
                inv_n1=1.0 / float(Cc * P),        # GLOBAL pixel counts, not per-tile
                inv_n2=1.0 / float(2 * Cc * P)),
        grid=(nt,),
        out_shape=(jax.ShapeDtypeStruct((Cc, P), jnp.float32),
                   jax.ShapeDtypeStruct((8, nt * 128), jnp.float32)),
        in_specs=[pl.BlockSpec((24, tile), lambda i: (0, i)),
                  const_spec(wx), const_spec(bx), const_spec(wo),
                  const_spec(wfd), const_spec(west), const_spec(bsr)],
        out_specs=(pl.BlockSpec((Cc, tile), lambda i: (0, i)),
                   pl.BlockSpec((8, 128), lambda i: (0, i))),
        compiler_params=pltpu.CompilerParams(
            dimension_semantics=("parallel",),        # both v7x TCs stream tiles
            vmem_limit_bytes=48 * 1024 * 1024),
    )(x, wx, bx, wo, wfd, west, bsr)

    output = out_cp.reshape(Cc, H, W)                                   # (C, H, W)
    loss = jnp.sum(loss_parts) if train else None
    return output, loss


# ----------------------------------------------------------------------------
if __name__ == "__main__":
    key = jax.random.PRNGKey(0)
    k_data, k_tgt, k_hf, k_par = jax.random.split(key, 4)

    T, H, W = 3, 16, 16
    data = jax.random.normal(k_data, (T, H, W, C), jnp.float32)
    target = jax.random.normal(k_tgt, (1, C, H, W), jnp.float32)
    high_frames = jax.random.normal(k_hf, (T, C, H, W), jnp.float32)
    params = init_params(k_par, c=C)

    # tile_p=128 -> grid=(2,): exercises the tiled / per-tile-loss path even
    # at toy sizes (at real frame sizes the default tile is up to 8192 lanes).
    output, loss = vsr_forward(params, data, target, high_frames,
                               estimated_image=None, train=True, tile_p=128)
    jax.block_until_ready((output, loss))
    assert output.shape == (C, H, W)
    assert loss.shape == ()
    print("KERNEL_OK")
</pallas_src>

<mosaic_0001>
module attributes {stable_mosaic.version = 11 : i64} {
  func.func @_vsr_kernel(%arg0: i32, %arg1: memref<24x128xbf16, #tpu.memory_space<vmem>>, %arg2: memref<40x24xf32, #tpu.memory_space<vmem>>, %arg3: memref<40x1xf32, #tpu.memory_space<vmem>>, %arg4: memref<15x3xf32, #tpu.memory_space<vmem>>, %arg5: memref<3x12xf32, #tpu.memory_space<vmem>>, %arg6: memref<3x3xf32, #tpu.memory_space<vmem>>, %arg7: memref<3x1xf32, #tpu.memory_space<vmem>>, %arg8: memref<3x128xf32, #tpu.memory_space<vmem>>, %arg9: memref<8x128xf32, #tpu.memory_space<vmem>>) attributes {dimension_semantics = [#tpu.dimension_semantics<parallel>], iteration_bounds = array<i64: 2>, scalar_prefetch = 0 : i64, scratch_operands = 0 : i64, tpu.core_type = #tpu.core_type<tc>, window_params = [{transform_indices = @transform_0, window_bounds = array<i64: 24, 128>}, {pipeline_mode = #tpu.pipeline_mode<synchronous>, transform_indices = @transform_1, window_bounds = array<i64: 40, 24>}, {pipeline_mode = #tpu.pipeline_mode<synchronous>, transform_indices = @transform_2, window_bounds = array<i64: 40, 1>}, {pipeline_mode = #tpu.pipeline_mode<synchronous>, transform_indices = @transform_3, window_bounds = array<i64: 15, 3>}, {pipeline_mode = #tpu.pipeline_mode<synchronous>, transform_indices = @transform_4, window_bounds = array<i64: 3, 12>}, {pipeline_mode = #tpu.pipeline_mode<synchronous>, transform_indices = @transform_5, window_bounds = array<i64: 3, 3>}, {pipeline_mode = #tpu.pipeline_mode<synchronous>, transform_indices = @transform_6, window_bounds = array<i64: 3, 1>}, {transform_indices = @transform_7, window_bounds = array<i64: 3, 128>}, {transform_indices = @transform_8, window_bounds = array<i64: 8, 128>}]} {
    %c0 = arith.constant 0 : index
    %c0_0 = arith.constant 0 : index
    %0 = vector.load %arg1[%c0, %c0_0] : memref<24x128xbf16, #tpu.memory_space<vmem>>, vector<24x128xbf16>
    %1 = arith.extf %0 : vector<24x128xbf16> to vector<24x128xf32>
    %c0_1 = arith.constant 0 : index
    %c0_2 = arith.constant 0 : index
    %2 = vector.load %arg2[%c0_1, %c0_2] : memref<40x24xf32, #tpu.memory_space<vmem>>, vector<40x24xf32>
    %cst = arith.constant dense<0.000000e+00> : vector<40x128xf32>
    %3 = tpu.matmul %2, %1, %cst {dimension_numbers = #tpu.dot_dimension_numbers<[1], [0], [0], [1], [0, 0, 1, 1], [], []>} : vector<40x24xf32>, vector<24x128xf32>, vector<40x128xf32> -> vector<40x128xf32>
    %c0_3 = arith.constant 0 : index
    %c0_4 = arith.constant 0 : index
    %4 = vector.load %arg3[%c0_3, %c0_4] : memref<40x1xf32, #tpu.memory_space<vmem>>, vector<40x1xf32>
    %5 = vector.broadcast %4 : vector<40x1xf32> to vector<40x128xf32>
    %6 = arith.addf %3, %5 : vector<40x128xf32>
    %c0_5 = arith.constant 0 : index
    %c0_6 = arith.constant 0 : index
    %7 = vector.load %arg5[%c0_5, %c0_6] : memref<3x12xf32, #tpu.memory_space<vmem>>, vector<3x12xf32>
    %c0_7 = arith.constant 0 : index
    %c0_8 = arith.constant 0 : index
    %8 = vector.load %arg4[%c0_7, %c0_8] : memref<15x3xf32, #tpu.memory_space<vmem>>, vector<15x3xf32>
    %c0_9 = arith.constant 0 : index
    %c0_10 = arith.constant 0 : index
    %9 = vector.load %arg6[%c0_9, %c0_10] : memref<3x3xf32, #tpu.memory_space<vmem>>, vector<3x3xf32>
    %c0_11 = arith.constant 0 : index
    %c0_12 = arith.constant 0 : index
    %10 = vector.load %arg7[%c0_11, %c0_12] : memref<3x1xf32, #tpu.memory_space<vmem>>, vector<3x1xf32>
    %11 = vector.extract_strided_slice %6 {offsets = [12, 0], sizes = [3, 128], strides = [1, 1]} : vector<40x128xf32> to vector<3x128xf32>
    %12 = vector.extract_strided_slice %6 {offsets = [0, 0], sizes = [12, 128], strides = [1, 1]} : vector<40x128xf32> to vector<12x128xf32>
    %13 = tpu.iota {dimensions = array<i32: 0>} : vector<12x128xi32>
    %c6_i32 = arith.constant 6 : i32
    %14 = vector.broadcast %c6_i32 : i32 to vector<12x128xi32>
    %15 = arith.cmpi slt, %13, %14 : vector<12x128xi32>
    %16 = math.tanh %12 : vector<12x128xf32>
    %cst_13 = arith.constant 0.000000e+00 : f32
    %17 = vector.broadcast %cst_13 : f32 to vector<12x128xf32>
    %18 = arith.cmpf ogt, %12, %17 : vector<12x128xf32>
    %19 = arith.extui %18 : vector<12x128xi1> to vector<12x128xi32>
    %20 = arith.sitofp %19 : vector<12x128xi32> to vector<12x128xf32>
    %21 = arith.select %15, %16, %20 : vector<12x128xi1>, vector<12x128xf32>
    %22 = vector.extract_strided_slice %6 {offsets = [15, 0], sizes = [3, 128], strides = [1, 1]} : vector<40x128xf32> to vector<3x128xf32>
    %23 = arith.addf %11, %22 : vector<3x128xf32>
    %24 = vector.extract_strided_slice %7 {offsets = [0, 0], sizes = [3, 1], strides = [1, 1]} : vector<3x12xf32> to vector<3x1xf32>
    %25 = vector.extract_strided_slice %21 {offsets = [0, 0], sizes = [1, 128], strides = [1, 1]} : vector<12x128xf32> to vector<1x128xf32>
    %26 = vector.broadcast %24 : vector<3x1xf32> to vector<3x128xf32>
    %27 = vector.broadcast %25 : vector<1x128xf32> to vector<3x128xf32>
    %28 = arith.mulf %26, %27 : vector<3x128xf32>
    %29 = vector.extract_strided_slice %7 {offsets = [0, 1], sizes = [3, 1], strides = [1, 1]} : vector<3x12xf32> to vector<3x1xf32>
    %30 = vector.extract_strided_slice %21 {offsets = [1, 0], sizes = [1, 128], strides = [1, 1]} : vector<12x128xf32> to vector<1x128xf32>
    %31 = vector.broadcast %29 : vector<3x1xf32> to vector<3x128xf32>
    %32 = vector.broadcast %30 : vector<1x128xf32> to vector<3x128xf32>
    %33 = arith.mulf %31, %32 : vector<3x128xf32>
    %34 = arith.addf %28, %33 : vector<3x128xf32>
    %35 = vector.extract_strided_slice %7 {offsets = [0, 2], sizes = [3, 1], strides = [1, 1]} : vector<3x12xf32> to vector<3x1xf32>
    %36 = vector.extract_strided_slice %21 {offsets = [2, 0], sizes = [1, 128], strides = [1, 1]} : vector<12x128xf32> to vector<1x128xf32>
    %37 = vector.broadcast %35 : vector<3x1xf32> to vector<3x128xf32>
    %38 = vector.broadcast %36 : vector<1x128xf32> to vector<3x128xf32>
    %39 = arith.mulf %37, %38 : vector<3x128xf32>
    %40 = arith.addf %34, %39 : vector<3x128xf32>
    %41 = vector.extract_strided_slice %7 {offsets = [0, 3], sizes = [3, 1], strides = [1, 1]} : vector<3x12xf32> to vector<3x1xf32>
    %42 = vector.extract_strided_slice %21 {offsets = [3, 0], sizes = [1, 128], strides = [1, 1]} : vector<12x128xf32> to vector<1x128xf32>
    %43 = vector.broadcast %41 : vector<3x1xf32> to vector<3x128xf32>
    %44 = vector.broadcast %42 : vector<1x128xf32> to vector<3x128xf32>
    %45 = arith.mulf %43, %44 : vector<3x128xf32>
    %46 = arith.addf %40, %45 : vector<3x128xf32>
    %47 = vector.extract_strided_slice %7 {offsets = [0, 4], sizes = [3, 1], strides = [1, 1]} : vector<3x12xf32> to vector<3x1xf32>
    %48 = vector.extract_strided_slice %21 {offsets = [4, 0], sizes = [1, 128], strides = [1, 1]} : vector<12x128xf32> to vector<1x128xf32>
    %49 = vector.broadcast %47 : vector<3x1xf32> to vector<3x128xf32>
    %50 = vector.broadcast %48 : vector<1x128xf32> to vector<3x128xf32>
    %51 = arith.mulf %49, %50 : vector<3x128xf32>
    %52 = arith.addf %46, %51 : vector<3x128xf32>
    %53 = vector.extract_strided_slice %7 {offsets = [0, 5], sizes = [3, 1], strides = [1, 1]} : vector<3x12xf32> to vector<3x1xf32>
    %54 = vector.extract_strided_slice %21 {offsets = [5, 0], sizes = [1, 128], strides = [1, 1]} : vector<12x128xf32> to vector<1x128xf32>
    %55 = vector.broadcast %53 : vector<3x1xf32> to vector<3x128xf32>
    %56 = vector.broadcast %54 : vector<1x128xf32> to vector<3x128xf32>
    %57 = arith.mulf %55, %56 : vector<3x128xf32>
    %58 = arith.addf %52, %57 : vector<3x128xf32>
    %59 = vector.extract_strided_slice %7 {offsets = [0, 6], sizes = [3, 1], strides = [1, 1]} : vector<3x12xf32> to vector<3x1xf32>
    %60 = vector.extract_strided_slice %21 {offsets = [6, 0], sizes = [1, 128], strides = [1, 1]} : vector<12x128xf32> to vector<1x128xf32>
    %61 = vector.broadcast %59 : vector<3x1xf32> to vector<3x128xf32>
    %62 = vector.broadcast %60 : vector<1x128xf32> to vector<3x128xf32>
    %63 = arith.mulf %61, %62 : vector<3x128xf32>
    %64 = arith.addf %58, %63 : vector<3x128xf32>
    %65 = vector.extract_strided_slice %7 {offsets = [0, 7], sizes = [3, 1], strides = [1, 1]} : vector<3x12xf32> to vector<3x1xf32>
    %66 = vector.extract_strided_slice %21 {offsets = [7, 0], sizes = [1, 128], strides = [1, 1]} : vector<12x128xf32> to vector<1x128xf32>
    %67 = vector.broadcast %65 : vector<3x1xf32> to vector<3x128xf32>
    %68 = vector.broadcast %66 : vector<1x128xf32> to vector<3x128xf32>
    %69 = arith.mulf %67, %68 : vector<3x128xf32>
    %70 = arith.addf %64, %69 : vector<3x128xf32>
    %71 = vector.extract_strided_slice %7 {offsets = [0, 8], sizes = [3, 1], strides = [1, 1]} : vector<3x12xf32> to vector<3x1xf32>
    %72 = vector.extract_strided_slice %21 {offsets = [8, 0], sizes = [1, 128], strides = [1, 1]} : vector<12x128xf32> to vector<1x128xf32>
    %73 = vector.broadcast %71 : vector<3x1xf32> to vector<3x128xf32>
    %74 = vector.broadcast %72 : vector<1x128xf32> to vector<3x128xf32>
    %75 = arith.mulf %73, %74 : vector<3x128xf32>
    %76 = arith.addf %70, %75 : vector<3x128xf32>
    %77 = vector.extract_strided_slice %7 {offsets = [0, 9], sizes = [3, 1], strides = [1, 1]} : vector<3x12xf32> to vector<3x1xf32>
    %78 = vector.extract_strided_slice %21 {offsets = [9, 0], sizes = [1, 128], strides = [1, 1]} : vector<12x128xf32> to vector<1x128xf32>
    %79 = vector.broadcast %77 : vector<3x1xf32> to vector<3x128xf32>
    %80 = vector.broadcast %78 : vector<1x128xf32> to vector<3x128xf32>
    %81 = arith.mulf %79, %80 : vector<3x128xf32>
    %82 = arith.addf %76, %81 : vector<3x128xf32>
    %83 = vector.extract_strided_slice %7 {offsets = [0, 10], sizes = [3, 1], strides = [1, 1]} : vector<3x12xf32> to vector<3x1xf32>
    %84 = vector.extract_strided_slice %21 {offsets = [10, 0], sizes = [1, 128], strides = [1, 1]} : vector<12x128xf32> to vector<1x128xf32>
    %85 = vector.broadcast %83 : vector<3x1xf32> to vector<3x128xf32>
    %86 = vector.broadcast %84 : vector<1x128xf32> to vector<3x128xf32>
    %87 = arith.mulf %85, %86 : vector<3x128xf32>
    %88 = arith.addf %82, %87 : vector<3x128xf32>
    %89 = vector.extract_strided_slice %7 {offsets = [0, 11], sizes = [3, 1], strides = [1, 1]} : vector<3x12xf32> to vector<3x1xf32>
    %90 = vector.extract_strided_slice %21 {offsets = [11, 0], sizes = [1, 128], strides = [1, 1]} : vector<12x128xf32> to vector<1x128xf32>
    %91 = vector.broadcast %89 : vector<3x1xf32> to vector<3x128xf32>
    %92 = vector.broadcast %90 : vector<1x128xf32> to vector<3x128xf32>
    %93 = arith.mulf %91, %92 : vector<3x128xf32>
    %94 = arith.addf %88, %93 : vector<3x128xf32>
    %95 = arith.addf %23, %94 : vector<3x128xf32>
    %96 = vector.broadcast %10 : vector<3x1xf32> to vector<3x128xf32>
    %97 = arith.addf %95, %96 : vector<3x128xf32>
    %98 = vector.extract_strided_slice %6 {offsets = [18, 0], sizes = [15, 128], strides = [1, 1]} : vector<40x128xf32> to vector<15x128xf32>
    %99 = vector.extract_strided_slice %8 {offsets = [0, 0], sizes = [15, 1], strides = [1, 1]} : vector<15x3xf32> to vector<15x1xf32>
    %100 = vector.extract_strided_slice %97 {offsets = [0, 0], sizes = [1, 128], strides = [1, 1]} : vector<3x128xf32> to vector<1x128xf32>
    %101 = vector.broadcast %99 : vector<15x1xf32> to vector<15x128xf32>
    %102 = vector.broadcast %100 : vector<1x128xf32> to vector<15x128xf32>
    %103 = arith.mulf %101, %102 : vector<15x128xf32>
    %104 = vector.extract_strided_slice %8 {offsets = [0, 1], sizes = [15, 1], strides = [1, 1]} : vector<15x3xf32> to vector<15x1xf32>
    %105 = vector.extract_strided_slice %97 {offsets = [1, 0], sizes = [1, 128], strides = [1, 1]} : vector<3x128xf32> to vector<1x128xf32>
    %106 = vector.broadcast %104 : vector<15x1xf32> to vector<15x128xf32>
    %107 = vector.broadcast %105 : vector<1x128xf32> to vector<15x128xf32>
    %108 = arith.mulf %106, %107 : vector<15x128xf32>
    %109 = arith.addf %103, %108 : vector<15x128xf32>
    %110 = vector.extract_strided_slice %8 {offsets = [0, 2], sizes = [15, 1], strides = [1, 1]} : vector<15x3xf32> to vector<15x1xf32>
    %111 = vector.extract_strided_slice %97 {offsets = [2, 0], sizes = [1, 128], strides = [1, 1]} : vector<3x128xf32> to vector<1x128xf32>
    %112 = vector.broadcast %110 : vector<15x1xf32> to vector<15x128xf32>
    %113 = vector.broadcast %111 : vector<1x128xf32> to vector<15x128xf32>
    %114 = arith.mulf %112, %113 : vector<15x128xf32>
    %115 = arith.addf %109, %114 : vector<15x128xf32>
    %116 = arith.addf %98, %115 : vector<15x128xf32>
    %117 = vector.extract_strided_slice %116 {offsets = [0, 0], sizes = [12, 128], strides = [1, 1]} : vector<15x128xf32> to vector<12x128xf32>
    %118 = tpu.iota {dimensions = array<i32: 0>} : vector<12x128xi32>
    %c6_i32_14 = arith.constant 6 : i32
    %119 = vector.broadcast %c6_i32_14 : i32 to vector<12x128xi32>
    %120 = arith.cmpi slt, %118, %119 : vector<12x128xi32>
    %121 = math.tanh %117 : vector<12x128xf32>
    %cst_15 = arith.constant 0.000000e+00 : f32
    %122 = vector.broadcast %cst_15 : f32 to vector<12x128xf32>
    %123 = arith.cmpf ogt, %117, %122 : vector<12x128xf32>
    %124 = arith.extui %123 : vector<12x128xi1> to vector<12x128xi32>
    %125 = arith.sitofp %124 : vector<12x128xi32> to vector<12x128xf32>
    %126 = arith.select %120, %121, %125 : vector<12x128xi1>, vector<12x128xf32>
    %127 = vector.extract_strided_slice %116 {offsets = [12, 0], sizes = [3, 128], strides = [1, 1]} : vector<15x128xf32> to vector<3x128xf32>
    %cst_16 = arith.constant 0.000000e+00 : f32
    %128 = vector.broadcast %cst_16 : f32 to vector<3x128xf32>
    %129 = arith.cmpf ogt, %127, %128 : vector<3x128xf32>
    %cst_17 = arith.constant 0.000000e+00 : f32
    %130 = vector.broadcast %cst_17 : f32 to vector<3x128xf32>
    %131 = arith.select %129, %130, %97 : vector<3x128xi1>, vector<3x128xf32>
    %132 = vector.extract_strided_slice %7 {offsets = [0, 0], sizes = [3, 1], strides = [1, 1]} : vector<3x12xf32> to vector<3x1xf32>
    %133 = vector.extract_strided_slice %126 {offsets = [0, 0], sizes = [1, 128], strides = [1, 1]} : vector<12x128xf32> to vector<1x128xf32>
    %134 = vector.broadcast %132 : vector<3x1xf32> to vector<3x128xf32>
    %135 = vector.broadcast %133 : vector<1x128xf32> to vector<3x128xf32>
    %136 = arith.mulf %134, %135 : vector<3x128xf32>
    %137 = vector.extract_strided_slice %7 {offsets = [0, 1], sizes = [3, 1], strides = [1, 1]} : vector<3x12xf32> to vector<3x1xf32>
    %138 = vector.extract_strided_slice %126 {offsets = [1, 0], sizes = [1, 128], strides = [1, 1]} : vector<12x128xf32> to vector<1x128xf32>
    %139 = vector.broadcast %137 : vector<3x1xf32> to vector<3x128xf32>
    %140 = vector.broadcast %138 : vector<1x128xf32> to vector<3x128xf32>
    %141 = arith.mulf %139, %140 : vector<3x128xf32>
    %142 = arith.addf %136, %141 : vector<3x128xf32>
    %143 = vector.extract_strided_slice %7 {offsets = [0, 2], sizes = [3, 1], strides = [1, 1]} : vector<3x12xf32> to vector<3x1xf32>
    %144 = vector.extract_strided_slice %126 {offsets = [2, 0], sizes = [1, 128], strides = [1, 1]} : vector<12x128xf32> to vector<1x128xf32>
    %145 = vector.broadcast %143 : vector<3x1xf32> to vector<3x128xf32>
    %146 = vector.broadcast %144 : vector<1x128xf32> to vector<3x128xf32>
    %147 = arith.mulf %145, %146 : vector<3x128xf32>
    %148 = arith.addf %142, %147 : vector<3x128xf32>
    %149 = vector.extract_strided_slice %7 {offsets = [0, 3], sizes = [3, 1], strides = [1, 1]} : vector<3x12xf32> to vector<3x1xf32>
    %150 = vector.extract_strided_slice %126 {offsets = [3, 0], sizes = [1, 128], strides = [1, 1]} : vector<12x128xf32> to vector<1x128xf32>
    %151 = vector.broadcast %149 : vector<3x1xf32> to vector<3x128xf32>
    %152 = vector.broadcast %150 : vector<1x128xf32> to vector<3x128xf32>
    %153 = arith.mulf %151, %152 : vector<3x128xf32>
    %154 = arith.addf %148, %153 : vector<3x128xf32>
    %155 = vector.extract_strided_slice %7 {offsets = [0, 4], sizes = [3, 1], strides = [1, 1]} : vector<3x12xf32> to vector<3x1xf32>
    %156 = vector.extract_strided_slice %126 {offsets = [4, 0], sizes = [1, 128], strides = [1, 1]} : vector<12x128xf32> to vector<1x128xf32>
    %157 = vector.broadcast %155 : vector<3x1xf32> to vector<3x128xf32>
    %158 = vector.broadcast %156 : vector<1x128xf32> to vector<3x128xf32>
    %159 = arith.mulf %157, %158 : vector<3x128xf32>
    %160 = arith.addf %154, %159 : vector<3x128xf32>
    %161 = vector.extract_strided_slice %7 {offsets = [0, 5], sizes = [3, 1], strides = [1, 1]} : vector<3x12xf32> to vector<3x1xf32>
    %162 = vector.extract_strided_slice %126 {offsets = [5, 0], sizes = [1, 128], strides = [1, 1]} : vector<12x128xf32> to vector<1x128xf32>
    %163 = vector.broadcast %161 : vector<3x1xf32> to vector<3x128xf32>
    %164 = vector.broadcast %162 : vector<1x128xf32> to vector<3x128xf32>
    %165 = arith.mulf %163, %164 : vector<3x128xf32>
    %166 = arith.addf %160, %165 : vector<3x128xf32>
    %167 = vector.extract_strided_slice %7 {offsets = [0, 6], sizes = [3, 1], strides = [1, 1]} : vector<3x12xf32> to vector<3x1xf32>
    %168 = vector.extract_strided_slice %126 {offsets = [6, 0], sizes = [1, 128], strides = [1, 1]} : vector<12x128xf32> to vector<1x128xf32>
    %169 = vector.broadcast %167 : vector<3x1xf32> to vector<3x128xf32>
    %170 = vector.broadcast %168 : vector<1x128xf32> to vector<3x128xf32>
    %171 = arith.mulf %169, %170 : vector<3x128xf32>
    %172 = arith.addf %166, %171 : vector<3x128xf32>
    %173 = vector.extract_strided_slice %7 {offsets = [0, 7], sizes = [3, 1], strides = [1, 1]} : vector<3x12xf32> to vector<3x1xf32>
    %174 = vector.extract_strided_slice %126 {offsets = [7, 0], sizes = [1, 128], strides = [1, 1]} : vector<12x128xf32> to vector<1x128xf32>
    %175 = vector.broadcast %173 : vector<3x1xf32> to vector<3x128xf32>
    %176 = vector.broadcast %174 : vector<1x128xf32> to vector<3x128xf32>
    %177 = arith.mulf %175, %176 : vector<3x128xf32>
    %178 = arith.addf %172, %177 : vector<3x128xf32>
    %179 = vector.extract_strided_slice %7 {offsets = [0, 8], sizes = [3, 1], strides = [1, 1]} : vector<3x12xf32> to vector<3x1xf32>
    %180 = vector.extract_strided_slice %126 {offsets = [8, 0], sizes = [1, 128], strides = [1, 1]} : vector<12x128xf32> to vector<1x128xf32>
    %181 = vector.broadcast %179 : vector<3x1xf32> to vector<3x128xf32>
    %182 = vector.broadcast %180 : vector<1x128xf32> to vector<3x128xf32>
    %183 = arith.mulf %181, %182 : vector<3x128xf32>
    %184 = arith.addf %178, %183 : vector<3x128xf32>
    %185 = vector.extract_strided_slice %7 {offsets = [0, 9], sizes = [3, 1], strides = [1, 1]} : vector<3x12xf32> to vector<3x1xf32>
    %186 = vector.extract_strided_slice %126 {offsets = [9, 0], sizes = [1, 128], strides = [1, 1]} : vector<12x128xf32> to vector<1x128xf32>
    %187 = vector.broadcast %185 : vector<3x1xf32> to vector<3x128xf32>
    %188 = vector.broadcast %186 : vector<1x128xf32> to vector<3x128xf32>
    %189 = arith.mulf %187, %188 : vector<3x128xf32>
    %190 = arith.addf %184, %189 : vector<3x128xf32>
    %191 = vector.extract_strided_slice %7 {offsets = [0, 10], sizes = [3, 1], strides = [1, 1]} : vector<3x12xf32> to vector<3x1xf32>
    %192 = vector.extract_strided_slice %126 {offsets = [10, 0], sizes = [1, 128], strides = [1, 1]} : vector<12x128xf32> to vector<1x128xf32>
    %193 = vector.broadcast %191 : vector<3x1xf32> to vector<3x128xf32>
    %194 = vector.broadcast %192 : vector<1x128xf32> to vector<3x128xf32>
    %195 = arith.mulf %193, %194 : vector<3x128xf32>
    %196 = arith.addf %190, %195 : vector<3x128xf32>
    %197 = vector.extract_strided_slice %7 {offsets = [0, 11], sizes = [3, 1], strides = [1, 1]} : vector<3x12xf32> to vector<3x1xf32>
    %198 = vector.extract_strided_slice %126 {offsets = [11, 0], sizes = [1, 128], strides = [1, 1]} : vector<12x128xf32> to vector<1x128xf32>
    %199 = vector.broadcast %197 : vector<3x1xf32> to vector<3x128xf32>
    %200 = vector.broadcast %198 : vector<1x128xf32> to vector<3x128xf32>
    %201 = arith.mulf %199, %200 : vector<3x128xf32>
    %202 = arith.addf %196, %201 : vector<3x128xf32>
    %203 = arith.addf %11, %202 : vector<3x128xf32>
    %204 = vector.extract_strided_slice %9 {offsets = [0, 0], sizes = [3, 1], strides = [1, 1]} : vector<3x3xf32> to vector<3x1xf32>
    %205 = vector.extract_strided_slice %131 {offsets = [0, 0], sizes = [1, 128], strides = [1, 1]} : vector<3x128xf32> to vector<1x128xf32>
    %206 = vector.broadcast %204 : vector<3x1xf32> to vector<3x128xf32>
    %207 = vector.broadcast %205 : vector<1x128xf32> to vector<3x128xf32>
    %208 = arith.mulf %206, %207 : vector<3x128xf32>
    %209 = vector.extract_strided_slice %9 {offsets = [0, 1], sizes = [3, 1], strides = [1, 1]} : vector<3x3xf32> to vector<3x1xf32>
    %210 = vector.extract_strided_slice %131 {offsets = [1, 0], sizes = [1, 128], strides = [1, 1]} : vector<3x128xf32> to vector<1x128xf32>
    %211 = vector.broadcast %209 : vector<3x1xf32> to vector<3x128xf32>
    %212 = vector.broadcast %210 : vector<1x128xf32> to vector<3x128xf32>
    %213 = arith.mulf %211, %212 : vector<3x128xf32>
    %214 = arith.addf %208, %213 : vector<3x128xf32>
    %215 = vector.extract_strided_slice %9 {offsets = [0, 2], sizes = [3, 1], strides = [1, 1]} : vector<3x3xf32> to vector<3x1xf32>
    %216 = vector.extract_strided_slice %131 {offsets = [2, 0], sizes = [1, 128], strides = [1, 1]} : vector<3x128xf32> to vector<1x128xf32>
    %217 = vector.broadcast %215 : vector<3x1xf32> to vector<3x128xf32>
    %218 = vector.broadcast %216 : vector<1x128xf32> to vector<3x128xf32>
    %219 = arith.mulf %217, %218 : vector<3x128xf32>
    %220 = arith.addf %214, %219 : vector<3x128xf32>
    %221 = arith.addf %203, %220 : vector<3x128xf32>
    %222 = vector.broadcast %10 : vector<3x1xf32> to vector<3x128xf32>
    %223 = arith.addf %221, %222 : vector<3x128xf32>
    %c0_18 = arith.constant 0 : index
    %c0_19 = arith.constant 0 : index
    %224 = vector.load %arg8[%c0_18, %c0_19] : memref<3x128xf32, #tpu.memory_space<vmem>>, vector<3x128xf32>
    tpu.vector_store %arg8[%c0_18, %c0_19], %223 {strides = array<i32>} : memref<3x128xf32, #tpu.memory_space<vmem>>, vector<3x128xf32>,
    %225 = vector.extract_strided_slice %1 {offsets = [12, 0], sizes = [3, 128], strides = [1, 1]} : vector<24x128xf32> to vector<3x128xf32>
    %226 = vector.extract_strided_slice %1 {offsets = [15, 0], sizes = [3, 128], strides = [1, 1]} : vector<24x128xf32> to vector<3x128xf32>
    %227 = vector.extract_strided_slice %1 {offsets = [21, 0], sizes = [3, 128], strides = [1, 1]} : vector<24x128xf32> to vector<3x128xf32>
    %228 = arith.subf %226, %225 : vector<3x128xf32>
    %229 = math.absf %228 : vector<3x128xf32>
    %cst_20 = arith.constant 0.00130208337 : f32
    %230 = vector.broadcast %cst_20 : f32 to vector<3x128xf32>
    %231 = arith.mulf %229, %230 : vector<3x128xf32>
    %cst_21 = arith.constant 0.000000e+00 : f32
    %232 = vector.broadcast %cst_21 : f32 to vector<3x128xf32>
    %233 = arith.cmpf ogt, %225, %232 : vector<3x128xf32>
    %234 = arith.subf %223, %225 : vector<3x128xf32>
    %235 = math.absf %234 : vector<3x128xf32>
    %236 = arith.addf %229, %235 : vector<3x128xf32>
    %cst_22 = arith.constant 0.000000e+00 : f32
    %237 = vector.broadcast %cst_22 : f32 to vector<3x128xf32>
    %238 = arith.select %233, %236, %237 : vector<3x128xi1>, vector<3x128xf32>
    %cst_23 = arith.constant 6.51041686E-4 : f32
    %239 = vector.broadcast %cst_23 : f32 to vector<3x128xf32>
    %240 = arith.mulf %238, %239 : vector<3x128xf32>
    %241 = arith.addf %231, %240 : vector<3x128xf32>
    %242 = arith.subf %223, %226 : vector<3x128xf32>
    %243 = math.absf %242 : vector<3x128xf32>
    %244 = arith.subf %227, %223 : vector<3x128xf32>
    %245 = math.absf %244 : vector<3x128xf32>
    %246 = arith.addf %243, %245 : vector<3x128xf32>
    %cst_24 = arith.constant 0.000000e+00 : f32
    %247 = vector.broadcast %cst_24 : f32 to vector<3x128xf32>
    %248 = arith.cmpf ogt, %226, %247 : vector<3x128xf32>
    %cst_25 = arith.constant 0.000000e+00 : f32
    %249 = vector.broadcast %cst_25 : f32 to vector<3x128xf32>
    %250 = arith.select %248, %246, %249 : vector<3x128xi1>, vector<3x128xf32>
    %251 = arith.addf %246, %250 : vector<3x128xf32>
    %cst_26 = arith.constant 3.906250e-06 : f32
    %252 = vector.broadcast %cst_26 : f32 to vector<3x128xf32>
    %253 = arith.mulf %251, %252 : vector<3x128xf32>
    %254 = arith.addf %241, %253 : vector<3x128xf32>
    %255 = vector.shape_cast %254 : vector<3x128xf32> to vector<1x3x128xf32>
    %cst_27 = arith.constant dense<0.000000e+00> : vector<1xf32>
    %256 = vector.multi_reduction <add>, %255, %cst_27 [1, 2] : vector<1x3x128xf32> to vector<1xf32>
    %257 = vector.shape_cast %256 : vector<1xf32> to vector<1x1x1xf32>
    %258 = vector.extract %257[0, 0, 0] : f32 from vector<1x1x1xf32>
    %259 = tpu.iota {dimensions = array<i32: 0>} : vector<8x128xi32>
    %c128_i32 = arith.constant 128 : i32
    %260 = vector.broadcast %c128_i32 : i32 to vector<8x128xi32>
    %261 = arith.muli %259, %260 : vector<8x128xi32>
    %262 = tpu.iota {dimensions = array<i32: 1>} : vector<8x128xi32>
    %263 = arith.addi %261, %262 : vector<8x128xi32>
    %c0_i32 = arith.constant 0 : i32
    %264 = vector.broadcast %c0_i32 : i32 to vector<8x128xi32>
    %265 = arith.cmpi eq, %263, %264 : vector<8x128xi32>
    %cst_28 = arith.constant 0.000000e+00 : f32
    %266 = vector.broadcast %258 : f32 to vector<8x128xf32>
    %267 = vector.broadcast %cst_28 : f32 to vector<8x128xf32>
    %268 = arith.select %265, %266, %267 : vector<8x128xi1>, vector<8x128xf32>
    %c0_29 = arith.constant 0 : index
    %c0_30 = arith.constant 0 : index
    %269 = vector.load %arg9[%c0_29, %c0_30] : memref<8x128xf32, #tpu.memory_space<vmem>>, vector<8x128xf32>
    tpu.vector_store %arg9[%c0_29, %c0_30], %268 {strides = array<i32>} : memref<8x128xf32, #tpu.memory_space<vmem>>, vector<8x128xf32>,
    return
  }
  func.func @transform_0(%arg0: i32) -> (i32, i32) {
    %c0_i32 = arith.constant 0 : i32
    %c0_i32_0 = arith.constant 0 : i32
    return %c0_i32, %arg0 : i32, i32
  }
  func.func @transform_1(%arg0: i32) -> (i32, i32) {
    %c0_i32 = arith.constant 0 : i32
    %c0_i32_0 = arith.constant 0 : i32
    %c0_i32_1 = arith.constant 0 : i32
    return %c0_i32, %c0_i32_0 : i32, i32
  }
  func.func @transform_2(%arg0: i32) -> (i32, i32) {
    %c0_i32 = arith.constant 0 : i32
    %c0_i32_0 = arith.constant 0 : i32
    %c0_i32_1 = arith.constant 0 : i32
    return %c0_i32, %c0_i32_0 : i32, i32
  }
  func.func @transform_3(%arg0: i32) -> (i32, i32) {
    %c0_i32 = arith.constant 0 : i32
    %c0_i32_0 = arith.constant 0 : i32
    %c0_i32_1 = arith.constant 0 : i32
    return %c0_i32, %c0_i32_0 : i32, i32
  }
  func.func @transform_4(%arg0: i32) -> (i32, i32) {
    %c0_i32 = arith.constant 0 : i32
    %c0_i32_0 = arith.constant 0 : i32
    %c0_i32_1 = arith.constant 0 : i32
    return %c0_i32, %c0_i32_0 : i32, i32
  }
  func.func @transform_5(%arg0: i32) -> (i32, i32) {
    %c0_i32 = arith.constant 0 : i32
    %c0_i32_0 = arith.constant 0 : i32
    %c0_i32_1 = arith.constant 0 : i32
    return %c0_i32, %c0_i32_0 : i32, i32
  }
  func.func @transform_6(%arg0: i32) -> (i32, i32) {
    %c0_i32 = arith.constant 0 : i32
    %c0_i32_0 = arith.constant 0 : i32
    %c0_i32_1 = arith.constant 0 : i32
    return %c0_i32, %c0_i32_0 : i32, i32
  }
  func.func @transform_7(%arg0: i32) -> (i32, i32) {
    %c0_i32 = arith.constant 0 : i32
    %c0_i32_0 = arith.constant 0 : i32
    return %c0_i32, %arg0 : i32, i32
  }
  func.func @transform_8(%arg0: i32) -> (i32, i32) {
    %c0_i32 = arith.constant 0 : i32
    %c0_i32_0 = arith.constant 0 : i32
    return %c0_i32, %arg0 : i32, i32
  }
}

</mosaic_0001>

<llo_original>
// kernel: vsr_forward.1
$region0: #{vsr_forward.1}
  #allocation0 [shape = 'u32[]', space=smem, size = 0x4, offset = 0x4, fixed_abs, tag = 'smem constant byte address 0x4 - core index']
  #allocation1 [shape = 'u32[144,128]{1,0:T(1,128)}', space=vmem, size = 0x12000, scoped, tag = 'internal scratch']
  %s0 = inlined_call_operand.vmem [shape: bf16[24,256], index: 0, kind: input, shape index: {}]
  %s1 = inlined_call_operand.vmem [shape: f32[40,24], index: 1, kind: input, shape index: {}]
  %s2 = inlined_call_operand.vmem [shape: f32[40,1], index: 2, kind: input, shape index: {}]
  %s3 = inlined_call_operand.vmem [shape: f32[15,3], index: 3, kind: input, shape index: {}]
  %s4 = inlined_call_operand.vmem [shape: f32[3,12], index: 4, kind: input, shape index: {}]
  %s5 = inlined_call_operand.vmem [shape: f32[3,3], index: 5, kind: input, shape index: {}]
  %s6 = inlined_call_operand.vmem [shape: f32[3,1], index: 6, kind: input, shape index: {}]
  %s7 = inlined_call_operand.vmem [shape: f32[3,256], index: 7, kind: output, shape index: {0}]
  %s8 = inlined_call_operand.vmem [shape: f32[8,256], index: 8, kind: output, shape index: {1}]
  %9 = xla_tuple %s7, %s8
  %s10 = sld [smem:[#allocation0]]
  $region110: #{vsr_forward.1} parent=0
    _
  %s12 = ssub.s32 1, %s10
  %s13 = scalar_select 0, %s12, %s10
  $region1: #{vsr_forward.1} parent=0
    #allocation2 [shape = 'u8[12288]{0}', space=vmem, size = 0x3000, scoped, tag = 'input window, operand 0']
    loop: start=0, step=1, limit=4
    $region2: #{vsr_forward.1} parent=1 // loop_pre_header
      _
    $region3: #{vsr_forward.1} parent=1 // loop_header
      %s15 = sphi 0, %s19
      %p16 = scmp.ge.s32.totalorder %s15, 4
      %s25 = sphi 0, %s27
      %s28 = sphi 0, %s25
      %s29 = sphi 0, %s28
      %s45 = sphi 0, %s29
      %s49 = sphi 0, %s49
      %s51 = sphi 0, %s49
      %s52 = sphi 0, %s51
      %s66 = sphi 0, %s52
      %s70 = sphi 0, %s70
      %s72 = sphi 0, %s70
      %s73 = sphi 0, %s72
      %s87 = sphi 0, %s73
      %s91 = sphi 0, %s91
      %s93 = sphi 0, %s91
      %s94 = sphi 0, %s93
      %s108 = sphi 0, %s94
      %s112 = sphi 0, %s112
      %s114 = sphi 0, %s112
      %s115 = sphi 0, %s114
      %s129 = sphi 0, %s115
      %s133 = sphi 0, %s133
      %s135 = sphi 0, %s133
      %s136 = sphi 0, %s135
      %s150 = sphi 0, %s136
      %s154 = sphi 0, %s154
      %s156 = sphi 0, %s154
      %s157 = sphi 0, %s156
      %s171 = sphi 0, %s157
      %s177 = sphi 0, %s179
      %s180 = sphi 0, %s177
      %s181 = sphi 0, %s180
      %s197 = sphi 0, %s181
      %s203 = sphi 0, %s205
      %s206 = sphi 0, %s203
      %s207 = sphi 0, %s206
      %s223 = sphi 0, %s207
    $region4: #{vsr_forward.1} parent=1 // loop_header_branch
      %18 = sbr.rel (%p16) target = $region8
    $region5: #{vsr_forward.1} parent=1 // loop_body
      %s20 = ssub.s32 %s15, 1
      %s21 = ssub.s32 %s15, 2
      %s22 = sadd.s32 %s15, 1
      %s23 = ssub.s32 %s15, %s22
      %p24 = scmp.eq.s32.totalorder %s23, 0
      %s26 = sadd.s32 %s25, 1
      %s27 = scalar_select %p24, %s25, %s26
      %p30 = pneg %p24
      %p31 = scmp.eq.s32.totalorder %s15, 1
      %p32 = por %p30, %p31
      %p33 = scmp.ne.s32.totalorder %s25, %s28
      %p34 = scmp.eq.s32.totalorder %s15, 0
      %p35 = por %p33, %p34
      %p36 = scmp.ne.s32.totalorder %s25, %s28
      %p37 = scmp.eq.s32.totalorder %s20, 1
      %p38 = por %p36, %p37
      %p39 = scmp.ne.s32.totalorder %s28, %s29
      %p40 = scmp.eq.s32.totalorder %s20, 0
      %p41 = por %p39, %p40
      %p42 = scmp.ne.s32.totalorder %s28, %s29
      %p43 = scmp.eq.s32.totalorder %s21, 1
      %p44 = por %p42, %p43
      %p46 = scmp.ne.s32.totalorder %s29, %s45
      %p47 = scmp.eq.s32.totalorder %s21, 0
      %p48 = por %p46, %p47
      %s50 = sadd.s32 %s49, 1
      %p53 = scmp.eq.s32.totalorder %s15, 1
      %p54 = scmp.ne.s32.totalorder %s49, %s51
      %p55 = scmp.eq.s32.totalorder %s15, 0
      %p56 = por %p54, %p55
      %p57 = scmp.ne.s32.totalorder %s49, %s51
      %p58 = scmp.eq.s32.totalorder %s20, 1
      %p59 = por %p57, %p58
      %p60 = scmp.ne.s32.totalorder %s51, %s52
      %p61 = scmp.eq.s32.totalorder %s20, 0
      %p62 = por %p60, %p61
      %p63 = scmp.ne.s32.totalorder %s51, %s52
      %p64 = scmp.eq.s32.totalorder %s21, 1
      %p65 = por %p63, %p64
      %p67 = scmp.ne.s32.totalorder %s52, %s66
      %p68 = scmp.eq.s32.totalorder %s21, 0
      %p69 = por %p67, %p68
      %s71 = sadd.s32 %s70, 1
      %p74 = scmp.eq.s32.totalorder %s15, 1
      %p75 = scmp.ne.s32.totalorder %s70, %s72
      %p76 = scmp.eq.s32.totalorder %s15, 0
      %p77 = por %p75, %p76
      %p78 = scmp.ne.s32.totalorder %s70, %s72
      %p79 = scmp.eq.s32.totalorder %s20, 1
      %p80 = por %p78, %p79
      %p81 = scmp.ne.s32.totalorder %s72, %s73
      %p82 = scmp.eq.s32.totalorder %s20, 0
      %p83 = por %p81, %p82
      %p84 = scmp.ne.s32.totalorder %s72, %s73
      %p85 = scmp.eq.s32.totalorder %s21, 1
      %p86 = por %p84, %p85
      %p88 = scmp.ne.s32.totalorder %s73, %s87
      %p89 = scmp.eq.s32.totalorder %s21, 0
      %p90 = por %p88, %p89
      %s92 = sadd.s32 %s91, 1
      %p95 = scmp.eq.s32.totalorder %s15, 1
      %p96 = scmp.ne.s32.totalorder %s91, %s93
      %p97 = scmp.eq.s32.totalorder %s15, 0
      %p98 = por %p96, %p97
      %p99 = scmp.ne.s32.totalorder %s91, %s93
      %p100 = scmp.eq.s32.totalorder %s20, 1
      %p101 = por %p99, %p100
      %p102 = scmp.ne.s32.totalorder %s93, %s94
      %p103 = scmp.eq.s32.totalorder %s20, 0
      %p104 = por %p102, %p103
      %p105 = scmp.ne.s32.totalorder %s93, %s94
      %p106 = scmp.eq.s32.totalorder %s21, 1
      %p107 = por %p105, %p106
      %p109 = scmp.ne.s32.totalorder %s94, %s108
      %p110 = scmp.eq.s32.totalorder %s21, 0
      %p111 = por %p109, %p110
      %s113 = sadd.s32 %s112, 1
      %p116 = scmp.eq.s32.totalorder %s15, 1
      %p117 = scmp.ne.s32.totalorder %s112, %s114
      %p118 = scmp.eq.s32.totalorder %s15, 0
      %p119 = por %p117, %p118
      %p120 = scmp.ne.s32.totalorder %s112, %s114
      %p121 = scmp.eq.s32.totalorder %s20, 1
      %p122 = por %p120, %p121
      %p123 = scmp.ne.s32.totalorder %s114, %s115
      %p124 = scmp.eq.s32.totalorder %s20, 0
      %p125 = por %p123, %p124
      %p126 = scmp.ne.s32.totalorder %s114, %s115
      %p127 = scmp.eq.s32.totalorder %s21, 1
      %p128 = por %p126, %p127
      %p130 = scmp.ne.s32.totalorder %s115, %s129
      %p131 = scmp.eq.s32.totalorder %s21, 0
      %p132 = por %p130, %p131
      %s134 = sadd.s32 %s133, 1
      %p137 = scmp.eq.s32.totalorder %s15, 1
      %p138 = scmp.ne.s32.totalorder %s133, %s135
      %p139 = scmp.eq.s32.totalorder %s15, 0
      %p140 = por %p138, %p139
      %p141 = scmp.ne.s32.totalorder %s133, %s135
      %p142 = scmp.eq.s32.totalorder %s20, 1
      %p143 = por %p141, %p142
      %p144 = scmp.ne.s32.totalorder %s135, %s136
      %p145 = scmp.eq.s32.totalorder %s20, 0
      %p146 = por %p144, %p145
      %p147 = scmp.ne.s32.totalorder %s135, %s136
      %p148 = scmp.eq.s32.totalorder %s21, 1
      %p149 = por %p147, %p148
      %p151 = scmp.ne.s32.totalorder %s136, %s150
      %p152 = scmp.eq.s32.totalorder %s21, 0
      %p153 = por %p151, %p152
      %s155 = sadd.s32 %s154, 1
      %p158 = scmp.eq.s32.totalorder %s15, 1
      %p159 = scmp.ne.s32.totalorder %s154, %s156
      %p160 = scmp.eq.s32.totalorder %s15, 0
      %p161 = por %p159, %p160
      %p162 = scmp.ne.s32.totalorder %s154, %s156
      %p163 = scmp.eq.s32.totalorder %s20, 1
      %p164 = por %p162, %p163
      %p165 = scmp.ne.s32.totalorder %s156, %s157
      %p166 = scmp.eq.s32.totalorder %s20, 0
      %p167 = por %p165, %p166
      %p168 = scmp.ne.s32.totalorder %s156, %s157
      %p169 = scmp.eq.s32.totalorder %s21, 1
      %p170 = por %p168, %p169
      %p172 = scmp.ne.s32.totalorder %s157, %s171
      %p173 = scmp.eq.s32.totalorder %s21, 0
      %p174 = por %p172, %p173
      %s175 = ssub.s32 %s15, %s22
      %p176 = scmp.eq.s32.totalorder %s175, 0
      %s178 = sadd.s32 %s177, 1
      %s179 = scalar_select %p176, %s177, %s178
      %p182 = pneg %p176
      %p183 = scmp.eq.s32.totalorder %s15, 1
      %p184 = por %p182, %p183
      %p185 = scmp.ne.s32.totalorder %s177, %s180
      %p186 = scmp.eq.s32.totalorder %s15, 0
      %p187 = por %p185, %p186
      %p188 = scmp.ne.s32.totalorder %s177, %s180
      %p189 = scmp.eq.s32.totalorder %s20, 1
      %p190 = por %p188, %p189
      %p191 = scmp.ne.s32.totalorder %s180, %s181
      %p192 = scmp.eq.s32.totalorder %s20, 0
      %p193 = por %p191, %p192
      %p194 = scmp.ne.s32.totalorder %s180, %s181
      %p195 = scmp.eq.s32.totalorder %s21, 1
      %p196 = por %p194, %p195
      %p198 = scmp.ne.s32.totalorder %s181, %s197
      %p199 = scmp.eq.s32.totalorder %s21, 0
      %p200 = por %p198, %p199
      %s201 = ssub.s32 %s15, %s22
      %p202 = scmp.eq.s32.totalorder %s201, 0
      %s204 = sadd.s32 %s203, 1
      %s205 = scalar_select %p202, %s203, %s204
      %p208 = pneg %p202
      %p209 = scmp.eq.s32.totalorder %s15, 1
      %p210 = por %p208, %p209
      %p211 = scmp.ne.s32.totalorder %s203, %s206
      %p212 = scmp.eq.s32.totalorder %s15, 0
      %p213 = por %p211, %p212
      %p214 = scmp.ne.s32.totalorder %s203, %s206
      %p215 = scmp.eq.s32.totalorder %s20, 1
      %p216 = por %p214, %p215
      %p217 = scmp.ne.s32.totalorder %s206, %s207
      %p218 = scmp.eq.s32.totalorder %s20, 0
      %p219 = por %p217, %p218
      %p220 = scmp.ne.s32.totalorder %s206, %s207
      %p221 = scmp.eq.s32.totalorder %s21, 1
      %p222 = por %p220, %p221
      %p224 = scmp.ne.s32.totalorder %s207, %s223
      %p225 = scmp.eq.s32.totalorder %s21, 0
      %p226 = por %p224, %p225
      %p227 = scmp.le.s32.totalorder 1, %s15
      %p228 = scmp.lt.s32.totalorder %s15, 3
      %p229 = pnand %p227, %p228
      %p230 = pneg %p229
      // Predicated region
      $region9: #{vsr_forward.1} parent=5 // pred_check
        _
      $region10: #{vsr_forward.1} parent=5 // pred_check_branch
        %232 = sbr.rel (%p229) target = $region12
      $region11: #{vsr_forward.1} parent=5 // pred_region
        %s233 = ssub.s32 %s15, 1
        // Predicated region
        $region13: #{vsr_forward.1} parent=11 // pred_check
          %p234 = pneg %p62
        $region14: #{vsr_forward.1} parent=11 // pred_check_branch
          %236 = sbr.rel (%p234) target = $region16
        $region15: #{vsr_forward.1} parent=11 // pred_region
          _
        $region16: #{vsr_forward.1} parent=11 // pred_fallthru
          _
        // Predicated region
        $region17: #{vsr_forward.1} parent=11 // pred_check
          %p237 = pneg %p83
        $region18: #{vsr_forward.1} parent=11 // pred_check_branch
          %239 = sbr.rel (%p237) target = $region20
        $region19: #{vsr_forward.1} parent=11 // pred_region
          _
        $region20: #{vsr_forward.1} parent=11 // pred_fallthru
          _
        // Predicated region
        $region21: #{vsr_forward.1} parent=11 // pred_check
          %p240 = pneg %p104
        $region22: #{vsr_forward.1} parent=11 // pred_check_branch
          %242 = sbr.rel (%p240) target = $region24
        $region23: #{vsr_forward.1} parent=11 // pred_region
          _
        $region24: #{vsr_forward.1} parent=11 // pred_fallthru
          _
        // Predicated region
        $region25: #{vsr_forward.1} parent=11 // pred_check
          %p243 = pneg %p125
        $region26: #{vsr_forward.1} parent=11 // pred_check_branch
          %245 = sbr.rel (%p243) target = $region28
        $region27: #{vsr_forward.1} parent=11 // pred_region
          _
        $region28: #{vsr_forward.1} parent=11 // pred_fallthru
          _
        // Predicated region
        $region29: #{vsr_forward.1} parent=11 // pred_check
          %p246 = pneg %p146
        $region30: #{vsr_forward.1} parent=11 // pred_check_branch
          %248 = sbr.rel (%p246) target = $region32
        $region31: #{vsr_forward.1} parent=11 // pred_region
          _
        $region32: #{vsr_forward.1} parent=11 // pred_fallthru
          _
        // Predicated region
        $region33: #{vsr_forward.1} parent=11 // pred_check
          %p249 = pneg %p167
        $region34: #{vsr_forward.1} parent=11 // pred_check_branch
          %251 = sbr.rel (%p249) target = $region36
        $region35: #{vsr_forward.1} parent=11 // pred_region
          _
        $region36: #{vsr_forward.1} parent=11 // pred_fallthru
          _
      $region12: #{vsr_forward.1} parent=5 // pred_fallthru
        _
      %p252 = scmp.lt.s32.totalorder %s15, 2
      // Predicated region
      $region37: #{vsr_forward.1} parent=5 // pred_check
        %p253 = pneg %p252
      $region38: #{vsr_forward.1} parent=5 // pred_check_branch
        %255 = sbr.rel (%p253) target = $region40
      $region39: #{vsr_forward.1} parent=5 // pred_region
        // Predicated region
        $region41: #{vsr_forward.1} parent=39 // pred_check
          %p256 = pneg %p35
        $region42: #{vsr_forward.1} parent=39 // pred_check_branch
          %258 = sbr.rel (%p256) target = $region44
        $region43: #{vsr_forward.1} parent=39 // pred_region
          %s259 = sand.u32 %s25, 1
          %s260 = sand.u32 %s25, 1
          %s261 = smul.addr %s260, 12
          %s262 = scalar_lea.vmem [#allocation2], %s261
          %s263 = smul.addr %s15, 4
          %s264 = scalar_lea.vmem %s0, %s263
          // Predicated region
          $region45: #{vsr_forward.1} parent=43 // pred_check
            _
          $region46: #{vsr_forward.1} parent=43 // pred_check_branch
            %266 = sbr.rel (0) target = $region48
          $region47: #{vsr_forward.1} parent=43 // pred_region
            // Predicated region
            $region49: #{vsr_forward.1} parent=47 // pred_check
              _
            $region50: #{vsr_forward.1} parent=47 // pred_check_branch
              %268 = sbr.rel target = $region52
            $region51: #{vsr_forward.1} parent=47 // pred_region
              // Predicated region
              $region64: #{vsr_forward.1} parent=51 // pred_check
                _
              $region65: #{vsr_forward.1} parent=51 // pred_check_branch
                %288 = sbr.rel (0) target = $region67
              $region66: #{vsr_forward.1} parent=51 // pred_region
                loop: start=0, step=1, limit=1
                $region68: #{vsr_forward.1} parent=66 // loop_pre_header
                  _
                $region69: #{vsr_forward.1} parent=66 // loop_header
                  %s290 = sphi 0, %s294
                  %p291 = scmp.ge.s32.totalorder %s290, 1
                  %s295 = sphi %s264, %s264
                  %s296 = sphi %s262, %s262
                $region70: #{vsr_forward.1} parent=66 // loop_header_branch
                  %293 = sbr.rel (%p291) target = $region74
                $region71: #{vsr_forward.1} parent=66 // loop_body
                  _
                $region72: #{vsr_forward.1} parent=66 // loop_footer
                  %s294 = sadd.s32 1, %s290
                $region73: #{vsr_forward.1} parent=66 // loop_footer_branch
                  %289 = sbr.rel target = $region69
                $region74: #{vsr_forward.1} parent=66 // loop_exit
                  _
                %s298 = ssub.s32 16, 1
                loop: start=0, step=1, limit=1
                $region75: #{vsr_forward.1} parent=66 // loop_pre_header
                  _
                $region76: #{vsr_forward.1} parent=66 // loop_header
                  %s300 = sphi 0, %s304
                  %p301 = scmp.ge.s32.totalorder %s300, 1
                  %s305 = sphi %s264, %s264
                  %s306 = sphi %s262, %s262
                $region77: #{vsr_forward.1} parent=66 // loop_header_branch
                  %303 = sbr.rel (%p301) target = $region81
                $region78: #{vsr_forward.1} parent=66 // loop_body
                  %v307 = vld [vmem:[%s305] sm:%s298]
                  %308 = vst [vmem:[%s306] sm:%s298] %v307
                  %v309 = vld [vmem:[%s305 + $0x8] sm:%s298]
                  %310 = vst [vmem:[%s306 + $0x4] sm:%s298] %v309
                  %v311 = vld [vmem:[%s305 + $0x10] sm:%s298]
                  %312 = vst [vmem:[%s306 + $0x8] sm:%s298] %v311
                $region79: #{vsr_forward.1} parent=66 // loop_footer
                  %s304 = sadd.s32 1, %s300
                $region80: #{vsr_forward.1} parent=66 // loop_footer_branch
                  %299 = sbr.rel target = $region76
                $region81: #{vsr_forward.1} parent=66 // loop_exit
                  _
              $region67: #{vsr_forward.1} parent=51 // pred_fallthru
                _
            $region52: #{vsr_forward.1} parent=47 // pred_fallthru
              _
            // Predicated region
            $region53: #{vsr_forward.1} parent=47 // pred_check
              _
            $region54: #{vsr_forward.1} parent=47 // pred_check_branch
              %270 = sbr.rel (0) target = $region56
            $region55: #{vsr_forward.1} parent=47 // pred_region
              %s272 = ssub.s32 16, 1
              loop: start=0, step=1, limit=1
              $region57: #{vsr_forward.1} parent=55 // loop_pre_header
                _
              $region58: #{vsr_forward.1} parent=55 // loop_header
                %s274 = sphi 0, %s278
                %p275 = scmp.ge.s32.totalorder %s274, 1
                %s279 = sphi %s264, %s264
                %s280 = sphi %s262, %s262
              $region59: #{vsr_forward.1} parent=55 // loop_header_branch
                %277 = sbr.rel (%p275) target = $region63
              $region60: #{vsr_forward.1} parent=55 // loop_body
                %v281 = vld [vmem:[%s279] sm:%s272]
                %282 = vst [vmem:[%s280] sm:%s272] %v281
                %v283 = vld [vmem:[%s279 + $0x8] sm:%s272]
                %284 = vst [vmem:[%s280 + $0x4] sm:%s272] %v283
                %v285 = vld [vmem:[%s279 + $0x10] sm:%s272]
                %286 = vst [vmem:[%s280 + $0x8] sm:%s272] %v285
              $region61: #{vsr_forward.1} parent=55 // loop_footer
                %s278 = sadd.s32 1, %s274
              $region62: #{vsr_forward.1} parent=55 // loop_footer_branch
                %273 = sbr.rel target = $region58
              $region63: #{vsr_forward.1} parent=55 // loop_exit
                _
            $region56: #{vsr_forward.1} parent=47 // pred_fallthru
              _
          $region48: #{vsr_forward.1} parent=43 // pred_fallthru
            _
          %313 = vnop
        $region44: #{vsr_forward.1} parent=39 // pred_fallthru
          _
      $region40: #{vsr_forward.1} parent=5 // pred_fallthru
        _
      %p314 = scmp.le.s32.totalorder 1, %s15
      %p315 = scmp.lt.s32.totalorder %s15, 3
      %p316 = pnand %p314, %p315
      %p317 = pneg %p316
      // Predicated region
      $region82: #{vsr_forward.1} parent=5 // pred_check
        _
      $region83: #{vsr_forward.1} parent=5 // pred_check_branch
        %319 = sbr.rel (%p316) target = $region85
      $region84: #{vsr_forward.1} parent=5 // pred_region
        %s320 = ssub.s32 %s15, 1
        %s321 = sand.u32 %s28, 1
        %s322 = sand.u32 %s28, 1
        %s323 = smul.addr %s322, 12
        %s324 = scalar_lea.vmem [#allocation2], %s323
        // Predicated region
        $region86: #{vsr_forward.1} parent=84 // pred_check
          %p325 = pneg %p41
        $region87: #{vsr_forward.1} parent=84 // pred_check_branch
          %327 = sbr.rel (%p325) target = $region89
        $region88: #{vsr_forward.1} parent=84 // pred_region
          _
        $region89: #{vsr_forward.1} parent=84 // pred_fallthru
          _
        %s328 = sand.u32 %s28, 1
        %s329 = sand.u32 %s28, 1
        %s330 = smul.addr %s329, 12
        %s331 = scalar_lea.vmem [#allocation2], %s330
        %p332 = pneg %p41
        %p333 = pneg %p38
        %p334 = pneg %p62
        %p335 = pneg %p59
        %p336 = pneg %p83
        %p337 = pneg %p80
        %p338 = pneg %p104
        %p339 = pneg %p101
        %p340 = pneg %p125
        %p341 = pneg %p122
        %p342 = pneg %p146
        %p343 = pneg %p143
        %p344 = pneg %p167
        %p345 = pneg %p164
        %p346 = pneg %p193
        %p347 = pneg %p190
        %p348 = scmp.lt.s32.totalorder %s20, 1
        %s349 = scalar_select %p348, %s20, 1
        %s350 = smul.addr %s349, 4
        %s351 = scalar_lea.vmem %s7, %s350
        %p352 = pneg %p219
        %p353 = pneg %p216
        %p354 = scmp.lt.s32.totalorder %s20, 1
        %s355 = scalar_select %p354, %s20, 1
        %s356 = smul.addr %s355, 8
        %s357 = scalar_lea.vmem %s8, %s356
        %p358 = scmp.lt.s32.totalorder %s20, 1
        %s359 = scalar_select %p358, %s20, 1
        %s360 = smul.addr %s359, 4
        %s361 = scalar_lea.vmem %s7, %s360
        %p362 = scmp.lt.s32.totalorder %s20, 1
        %s363 = scalar_select %p362, %s20, 1
        %s364 = smul.addr %s363, 8
        %s365 = scalar_lea.vmem %s8, %s364
        %v366 = vld [vmem:[%s324] sm:$0xf]
        %v367 = vld [vmem:[%s324 + $0x4] sm:$0xf]
        %v368 = vld [vmem:[%s324 + $0x8] sm:$0xf]
        %v369 = vunpack.c.l.bf16 %v366
        %v370 = vunpack.c.l.bf16 %v367
        %v371 = vunpack.c.l.bf16 %v368
        %v372 = vld [vmem:[%s1] sm:$0xff]
        %v373 = vld [vmem:[%s1 + $0x8] sm:$0xff]
        %v374 = vld [vmem:[%s1 + $0x10] sm:$0xff]
        %v375 = vld [vmem:[%s1 + $0x18] sm:$0xff]
        %v376 = vld [vmem:[%s1 + $0x20] sm:$0xff]
        %v377 = vld [vmem:[%s2] sm:$0xff]
        %v378 = vld [vmem:[%s2 + $0x8] sm:$0xff]
        %v379 = vld [vmem:[%s2 + $0x10] sm:$0xff]
        %v380 = vld [vmem:[%s2 + $0x18] sm:$0xff]
        %v381 = vld [vmem:[%s2 + $0x20] sm:$0xff]
        %383 = vset.pattern.permute.xlu0 0
        %384 = vperm.xlu0 %383, %v377
        %v385 = vpop.permute.xlu0 %384
        %388 = vset.pattern.permute.xlu0 0
        %389 = vperm.xlu0 %388, %v378
        %v390 = vpop.permute.xlu0 %389
        %393 = vset.pattern.permute.xlu0 0
        %394 = vperm.xlu0 %393, %v379
        %v395 = vpop.permute.xlu0 %394
        %398 = vset.pattern.permute.xlu0 0
        %399 = vperm.xlu0 %398, %v380
        %v400 = vpop.permute.xlu0 %399
        %403 = vset.pattern.permute.xlu0 0
        %404 = vperm.xlu0 %403, %v381
        %v405 = vpop.permute.xlu0 %404
        %vm407 = vcmask 195584
        %v409 = vsel %vm407, %v372, 0
        %v412 = vsel %vm407, %v373, 0
        %v415 = vsel %vm407, %v374, 0
        %v418 = vsel %vm407, %v375, 0
        %v421 = vsel %vm407, %v376, 0
        %423 = vmatprep.subr.mxu0 0.0
        %424 = vmatpush1.msra.mxu0 0.0
        %425 = vmatprep.subr.mxu0 0.0
        %426 = vmatpush1.msra.mxu0 0.0
        %427 = vmatprep.subr.mxu0 0.0
        %428 = vmatpush1.msra.mxu0 0.0
        %429 = vmatprep.subr.mxu0 0.0
        %430 = vmatpush1.msra.mxu0 0.0
        %431 = vmatprep.subr.mxu0 0.0
        %432 = vmatpush1.msra.mxu0 0.0
        %433 = vmatprep.subr.mxu0 0.0
        %434 = vmatpush1.msra.mxu0 0.0
        %435 = vmatprep.subr.mxu0 0.0
        %436 = vmatpush1.msra.mxu0 0.0
        %437 = vmatprep.subr.mxu0 0.0
        %438 = vmatpush1.msra.mxu0 0.0
        %439 = vmatprep.subr.mxu0 0.0
        %440 = vmatpush1.msra.mxu0 0.0
        %441 = vmatprep.subr.mxu0 0.0
        %442 = vmatpush1.msra.mxu0 0.0
        %443 = vmatprep.subr.mxu0 0.0
        %444 = vmatpush1.msra.mxu0 0.0
        %445 = vmatprep.subr.mxu0 0.0
        %446 = vmatpush1.msra.mxu0 0.0
        %447 = vmatprep.subr.mxu0 0.0
        %448 = vmatpush1.msra.mxu0 0.0
        %449 = vmatprep.subr.mxu0 0.0
        %450 = vmatpush1.msra.mxu0 %v371
        %451 = vmatprep.subr.mxu0 0.0
        %452 = vmatpush1.msra.mxu0 %v370
        %453 = vmatprep.subr.mxu0 0.0
        %454 = vmatpush1.msra.mxu0 %v369
        %455 = vmatprep.subr.mxu0 0.0
        %456 = vmatpush2.msra.mxu0 0.0
        %457 = vmatprep.subr.mxu0 0.0
        %458 = vmatpush2.msra.mxu0 0.0
        %459 = vmatprep.subr.mxu0 0.0
        %460 = vmatpush2.msra.mxu0 0.0
        %461 = vmatprep.subr.mxu0 0.0
        %462 = vmatpush2.msra.mxu0 0.0
        %463 = vmatprep.subr.mxu0 0.0
        %464 = vmatpush2.msra.mxu0 0.0
        %465 = vmatprep.subr.mxu0 0.0
        %466 = vmatpush2.msra.mxu0 0.0
        %467 = vmatprep.subr.mxu0 0.0
        %468 = vmatpush2.msra.mxu0 0.0
        %469 = vmatprep.subr.mxu0 0.0
        %470 = vmatpush2.msra.mxu0 0.0
        %471 = vmatprep.subr.mxu0 0.0
        %472 = vmatpush2.msra.mxu0 0.0
        %473 = vmatprep.subr.mxu0 0.0
        %474 = vmatpush2.msra.mxu0 0.0
        %475 = vmatprep.subr.mxu0 0.0
        %476 = vmatpush2.msra.mxu0 0.0
        %477 = vmatprep.subr.mxu0 0.0
        %478 = vmatpush2.msra.mxu0 0.0
        %479 = vmatprep.subr.mxu0 0.0
        %480 = vmatpush2.msra.mxu0 0.0
        %481 = vmatprep.subr.mxu0 0.0
        %482 = vmatpush2.msra.mxu0 0.0
        %483 = vmatprep.subr.mxu0 0.0
        %484 = vmatpush2.msra.mxu0 0.0
        %485 = vmatprep.subr.mxu0 0.0
        %486 = vmatpush2.msra.mxu0 0.0
        %487 = vmatprep.mubr.f32.mxu0 0.0
        %488 = vmatmul.mubr.f32.gmra.mxu0 %v409
        %v489 = vpop.f32.mrf.mxu0
        %v490 = vadd.f32 %v385, %v489
        %v491 = vpop.f32.mrf.mxu0
        %492 = vmatprep.mubr.f32.mxu0 0.0
        %493 = vmatmul.mubr.f32.gmra.mxu0 %v412
        %v494 = vpop.f32.mrf.mxu0
        %v495 = vadd.f32 %v390, %v494
        %v496 = vpop.f32.mrf.mxu0
        %497 = vmatprep.mubr.f32.mxu0 0.0
        %498 = vmatmul.mubr.f32.gmra.mxu0 %v415
        %v499 = vpop.f32.mrf.mxu0
        %v500 = vadd.f32 %v395, %v499
        %v501 = vpop.f32.mrf.mxu0
        %502 = vmatprep.mubr.f32.mxu0 0.0
        %503 = vmatmul.mubr.f32.gmra.mxu0 %v418
        %v504 = vpop.f32.mrf.mxu0
        %v505 = vadd.f32 %v400, %v504
        %v506 = vpop.f32.mrf.mxu0
        %507 = vmatprep.mubr.f32.mxu0 0.0
        %508 = vmatmul.mubr.f32.gmra.mxu0 %v421
        %v509 = vpop.f32.mrf.mxu0
        %v510 = vadd.f32 %v405, %v509
        %v511 = vpop.f32.mrf.mxu0
        %512 = vdwg.mxu0
        %v513 = vld [vmem:[%s4] sm:$0x7]
        %v514 = vld [vmem:[%s3] sm:$0xff]
        %v515 = vld [vmem:[%s3 + $0x8] sm:$0x7f]
        %v516 = vld [vmem:[%s5] sm:$0x7]
        %v517 = vld [vmem:[%s6] sm:$0x7]
        %v518 = vlaneseq
        %v519 = vshrl.u32 %v518, 7
        %v520 = vadd.s32 %v519, 8
        %vm521 = vcmp.lt.s32.totalorder %v519, 6
        %vm522 = vcmp.lt.s32.totalorder %v520, 6
        %v523 = vtanh.pop %v490
        %v524 = vtanh.pop %v495
        %vm525 = vcmp.gt.f32.partialorder %v490, 0.0
        %vm526 = vcmp.gt.f32.partialorder %v495, 0.0
        %v527 = vsel %vm525, 1, 0
        %v528 = vsel %vm526, 1, 0
        %v529 = vcvt.s32.f32 %v527
        %v530 = vcvt.s32.f32 %v528
        %v531 = vsel %vm521, %v523, %v529
        %v532 = vsel %vm522, %v524, %v530
        %vm535 = vcmask 1044480
        %v536 = vrot.slane %v495, 3
        %v537 = vrot.slane %v500, 3
        %v538 = vsel %vm535, %v536, %v537
        %v540 = vadd.f32 %v495, %v538
        %542 = vset.pattern.permute.xlu0 0
        %543 = vperm.xlu0 %542, %v513
        %v544 = vpop.permute.xlu0 %543
        %v546 = vlaneseq
        %v547 = vshrl.u32 %v546, 7
        %v548 = vsub.s32 0, %v547
        %v549 = vrot.slane %v531, %v548
        %v550 = vmul.f32 %v544, %v549
        %551 = vset.pattern.permute.xlu0 1
        %552 = vperm.xlu0 %551, %v513
        %v553 = vpop.permute.xlu0 %552
        %v555 = vlaneseq
        %v556 = vshrl.u32 %v555, 7
        %v557 = vsub.s32 1, %v556
        %v558 = vrot.slane %v531, %v557
        %v559 = vmul.f32 %v553, %v558
        %v560 = vadd.f32 %v550, %v559
        %561 = vset.pattern.permute.xlu0 2
        %562 = vperm.xlu0 %561, %v513
        %v563 = vpop.permute.xlu0 %562
        %v565 = vlaneseq
        %v566 = vshrl.u32 %v565, 7
        %v567 = vsub.s32 2, %v566
        %v568 = vrot.slane %v531, %v567
        %v569 = vmul.f32 %v563, %v568
        %v570 = vadd.f32 %v560, %v569
        %571 = vset.pattern.permute.xlu0 3
        %572 = vperm.xlu0 %571, %v513
        %v573 = vpop.permute.xlu0 %572
        %v575 = vlaneseq
        %v576 = vshrl.u32 %v575, 7
        %v577 = vsub.s32 3, %v576
        %v578 = vrot.slane %v531, %v577
        %v579 = vmul.f32 %v573, %v578
        %v580 = vadd.f32 %v570, %v579
        %581 = vset.pattern.permute.xlu0 4
        %582 = vperm.xlu0 %581, %v513
        %v583 = vpop.permute.xlu0 %582
        %v585 = vlaneseq
        %v586 = vshrl.u32 %v585, 7
        %v587 = vsub.s32 4, %v586
        %v588 = vrot.slane %v531, %v587
        %v589 = vmul.f32 %v583, %v588
        %v590 = vadd.f32 %v580, %v589
        %591 = vset.pattern.permute.xlu0 5
        %592 = vperm.xlu0 %591, %v513
        %v593 = vpop.permute.xlu0 %592
        %v595 = vlaneseq
        %v596 = vshrl.u32 %v595, 7
        %v597 = vsub.s32 5, %v596
        %v598 = vrot.slane %v531, %v597
        %v599 = vmul.f32 %v593, %v598
        %v600 = vadd.f32 %v590, %v599
        %601 = vset.pattern.permute.xlu0 6
        %602 = vperm.xlu0 %601, %v513
        %v603 = vpop.permute.xlu0 %602
        %v605 = vlaneseq
        %v606 = vshrl.u32 %v605, 7
        %v607 = vsub.s32 6, %v606
        %v608 = vrot.slane %v531, %v607
        %v609 = vmul.f32 %v603, %v608
        %v610 = vadd.f32 %v600, %v609
        %611 = vset.pattern.permute.xlu0 7
        %612 = vperm.xlu0 %611, %v513
        %v613 = vpop.permute.xlu0 %612
        %v615 = vlaneseq
        %v616 = vshrl.u32 %v615, 7
        %v617 = vsub.s32 7, %v616
        %v618 = vrot.slane %v531, %v617
        %v619 = vmul.f32 %v613, %v618
        %v620 = vadd.f32 %v610, %v619
        %621 = vset.pattern.permute.xlu0 8
        %622 = vperm.xlu0 %621, %v513
        %v623 = vpop.permute.xlu0 %622
        %v625 = vlaneseq
        %v626 = vshrl.u32 %v625, 7
        %v627 = vsub.s32 0, %v626
        %v628 = vrot.slane %v532, %v627
        %v629 = vmul.f32 %v623, %v628
        %v630 = vadd.f32 %v620, %v629
        %631 = vset.pattern.permute.xlu0 9
        %632 = vperm.xlu0 %631, %v513
        %v633 = vpop.permute.xlu0 %632
        %v635 = vlaneseq
        %v636 = vshrl.u32 %v635, 7
        %v637 = vsub.s32 1, %v636
        %v638 = vrot.slane %v532, %v637
        %v639 = vmul.f32 %v633, %v638
        %v640 = vadd.f32 %v630, %v639
        %641 = vset.pattern.permute.xlu0 10
        %642 = vperm.xlu0 %641, %v513
        %v643 = vpop.permute.xlu0 %642
        %v645 = vlaneseq
        %v646 = vshrl.u32 %v645, 7
        %v647 = vsub.s32 2, %v646
        %v648 = vrot.slane %v532, %v647
        %v649 = vmul.f32 %v643, %v648
        %v650 = vadd.f32 %v640, %v649
        %651 = vset.pattern.permute.xlu0 11
        %652 = vperm.xlu0 %651, %v513
        %v653 = vpop.permute.xlu0 %652
        %v655 = vlaneseq
        %v656 = vshrl.u32 %v655, 7
        %v657 = vsub.s32 3, %v656
        %v658 = vrot.slane %v532, %v657
        %v659 = vmul.f32 %v653, %v658
        %v660 = vadd.f32 %v650, %v659
        %v662 = vrot.slane %v660, 4
        %v664 = vadd.f32 %v540, %v662
        %666 = vset.pattern.permute.xlu0 0
        %667 = vperm.xlu0 %666, %v517
        %v668 = vpop.permute.xlu0 %667
        %v669 = vrot.slane %v668, 4
        %v671 = vadd.f32 %v664, %v669
        %673 = vset.pattern.permute.xlu0 0
        %674 = vperm.xlu0 %673, %v514
        %v675 = vpop.permute.xlu0 %674
        %678 = vset.pattern.permute.xlu0 0
        %679 = vperm.xlu0 %678, %v515
        %v680 = vpop.permute.xlu0 %679
        %v682 = vlaneseq
        %v683 = vshrl.u32 %v682, 7
        %v684 = vsub.s32 4, %v683
        %v685 = vrot.slane %v671, %v684
        %v686 = vmul.f32 %v675, %v685
        %v687 = vmul.f32 %v680, %v685
        %688 = vset.pattern.permute.xlu0 1
        %689 = vperm.xlu0 %688, %v514
        %v690 = vpop.permute.xlu0 %689
        %692 = vset.pattern.permute.xlu0 1
        %693 = vperm.xlu0 %692, %v515
        %v694 = vpop.permute.xlu0 %693
        %v696 = vlaneseq
        %v697 = vshrl.u32 %v696, 7
        %v698 = vsub.s32 5, %v697
        %v699 = vrot.slane %v671, %v698
        %v700 = vmul.f32 %v690, %v699
        %v701 = vmul.f32 %v694, %v699
        %v702 = vadd.f32 %v686, %v700
        %v703 = vadd.f32 %v687, %v701
        %704 = vset.pattern.permute.xlu0 2
        %705 = vperm.xlu0 %704, %v514
        %v706 = vpop.permute.xlu0 %705
        %708 = vset.pattern.permute.xlu0 2
        %709 = vperm.xlu0 %708, %v515
        %v710 = vpop.permute.xlu0 %709
        %v712 = vlaneseq
        %v713 = vshrl.u32 %v712, 7
        %v714 = vsub.s32 6, %v713
        %v715 = vrot.slane %v671, %v714
        %v716 = vmul.f32 %v706, %v715
        %v717 = vmul.f32 %v710, %v715
        %v718 = vadd.f32 %v702, %v716
        %v719 = vadd.f32 %v703, %v717
        %vm722 = vcmask 1041408
        %v723 = vrot.slane %v718, 6
        %v724 = vrot.slane %v719, 6
        %v725 = vsel %vm722, %v723, %v724
        %v729 = vadd.f32 %v500, %v723
        %v730 = vadd.f32 %v505, %v725
        %v731 = vadd.f32 %v510, %v724
        %v732 = vtanh.pop %v729
        %v733 = vtanh.pop %v730
        %vm734 = vcmp.gt.f32.partialorder %v729, 0.0
        %vm735 = vcmp.gt.f32.partialorder %v730, 0.0
        %v736 = vsel %vm734, 1, 0
        %v737 = vsel %vm735, 1, 0
        %v738 = vcvt.s32.f32 %v736
        %v739 = vcvt.s32.f32 %v737
        %vm742 = vcmask 1045504
        %v743 = vrot.slane %v732, 2
        %v744 = vrot.slane %v733, 2
        %v745 = vsel %vm742, %v743, %v744
        %v750 = vrot.slane %v738, 2
        %v751 = vrot.slane %v739, 2
        %v752 = vsel %vm742, %v750, %v751
        %v755 = vsel %vm521, %v745, %v752
        %v756 = vsel %vm522, %v744, %v751
        %vm757 = vcmp.gt.f32.partialorder %v731, 0.0
        %v759 = vrot.slane %v671, 6
        %v761 = vsel %vm735, 0.0, %v759
        %v762 = vsel %vm757, 0.0, %v759
        %v763 = vlaneseq
        %v764 = vshrl.u32 %v763, 7
        %v765 = vsub.s32 0, %v764
        %v766 = vrot.slane %v755, %v765
        %v767 = vmul.f32 %v544, %v766
        %v768 = vlaneseq
        %v769 = vshrl.u32 %v768, 7
        %v770 = vsub.s32 1, %v769
        %v771 = vrot.slane %v755, %v770
        %v772 = vmul.f32 %v553, %v771
        %v773 = vadd.f32 %v767, %v772
        %v774 = vlaneseq
        %v775 = vshrl.u32 %v774, 7
        %v776 = vsub.s32 2, %v775
        %v777 = vrot.slane %v755, %v776
        %v778 = vmul.f32 %v563, %v777
        %v779 = vadd.f32 %v773, %v778
        %v780 = vlaneseq
        %v781 = vshrl.u32 %v780, 7
        %v782 = vsub.s32 3, %v781
        %v783 = vrot.slane %v755, %v782
        %v784 = vmul.f32 %v573, %v783
        %v785 = vadd.f32 %v779, %v784
        %v786 = vlaneseq
        %v787 = vshrl.u32 %v786, 7
        %v788 = vsub.s32 4, %v787
        %v789 = vrot.slane %v755, %v788
        %v790 = vmul.f32 %v583, %v789
        %v791 = vadd.f32 %v785, %v790
        %v792 = vlaneseq
        %v793 = vshrl.u32 %v792, 7
        %v794 = vsub.s32 5, %v793
        %v795 = vrot.slane %v755, %v794
        %v796 = vmul.f32 %v593, %v795
        %v797 = vadd.f32 %v791, %v796
        %v798 = vlaneseq
        %v799 = vshrl.u32 %v798, 7
        %v800 = vsub.s32 6, %v799
        %v801 = vrot.slane %v755, %v800
        %v802 = vmul.f32 %v603, %v801
        %v803 = vadd.f32 %v797, %v802
        %v804 = vlaneseq
        %v805 = vshrl.u32 %v804, 7
        %v806 = vsub.s32 7, %v805
        %v807 = vrot.slane %v755, %v806
        %v808 = vmul.f32 %v613, %v807
        %v809 = vadd.f32 %v803, %v808
        %v810 = vlaneseq
        %v811 = vshrl.u32 %v810, 7
        %v812 = vsub.s32 0, %v811
        %v813 = vrot.slane %v756, %v812
        %v814 = vmul.f32 %v623, %v813
        %v815 = vadd.f32 %v809, %v814
        %v816 = vlaneseq
        %v817 = vshrl.u32 %v816, 7
        %v818 = vsub.s32 1, %v817
        %v819 = vrot.slane %v756, %v818
        %v820 = vmul.f32 %v633, %v819
        %v821 = vadd.f32 %v815, %v820
        %v822 = vlaneseq
        %v823 = vshrl.u32 %v822, 7
        %v824 = vsub.s32 2, %v823
        %v825 = vrot.slane %v756, %v824
        %v826 = vmul.f32 %v643, %v825
        %v827 = vadd.f32 %v821, %v826
        %v828 = vlaneseq
        %v829 = vshrl.u32 %v828, 7
        %v830 = vsub.s32 3, %v829
        %v831 = vrot.slane %v756, %v830
        %v832 = vmul.f32 %v653, %v831
        %v833 = vadd.f32 %v827, %v832
        %v835 = vrot.slane %v833, 4
        %v837 = vadd.f32 %v495, %v835
        %839 = vset.pattern.permute.xlu0 0
        %840 = vperm.xlu0 %839, %v516
        %v841 = vpop.permute.xlu0 %840
        %v843 = vlaneseq
        %v844 = vshrl.u32 %v843, 7
        %v845 = vsub.s32 6, %v844
        %v846 = vrot.slane %v761, %v845
        %v847 = vmul.f32 %v841, %v846
        %848 = vset.pattern.permute.xlu0 1
        %849 = vperm.xlu0 %848, %v516
        %v850 = vpop.permute.xlu0 %849
        %v852 = vlaneseq
        %v853 = vshrl.u32 %v852, 7
        %v854 = vsub.s32 7, %v853
        %v855 = vrot.slane %v761, %v854
        %v856 = vmul.f32 %v850, %v855
        %v857 = vadd.f32 %v847, %v856
        %858 = vset.pattern.permute.xlu0 2
        %859 = vperm.xlu0 %858, %v516
        %v860 = vpop.permute.xlu0 %859
        %v862 = vlaneseq
        %v863 = vshrl.u32 %v862, 7
        %v864 = vsub.s32 0, %v863
        %v865 = vrot.slane %v762, %v864
        %v866 = vmul.f32 %v860, %v865
        %v867 = vadd.f32 %v857, %v866
        %v869 = vrot.slane %v867, 4
        %v871 = vadd.f32 %v837, %v869
        %v872 = vadd.f32 %v871, %v669
        %873 = vst [vmem:[%s361 - $0x4] sm:$0x70] %v872
        %v875 = vrot.slane %v370, 5
        %v877 = vsub.f32 %v370, %v875
        %v878 = vsub.f32 %v371, %v875
        %v879 = vand.u32 2147483647, %v877
        %v880 = vand.u32 2147483647, %v878
        %v881 = vmul.f32 %v879, 0.0013020834
        %v882 = vmul.f32 %v880, 0.0013020834
        %vm883 = vcmp.gt.f32.partialorder %v370, 0.0
        %v884 = vsub.f32 %v872, %v370
        %v885 = vand.u32 2147483647, %v884
        %v887 = vrot.slane %v885, 5
        %v889 = vadd.f32 %v879, %v887
        %v890 = vadd.f32 %v880, %v887
        %v893 = vrot.slane %v889, 3
        %v894 = vrot.slane %v890, 3
        %v895 = vsel %vm535, %v893, %v894
        %v897 = vsel %vm883, %v895, 0.0
        %v898 = vmul.f32 %v897, 0.0006510417
        %v900 = vrot.slane %v898, 5
        %v902 = vadd.f32 %v881, %v900
        %v903 = vadd.f32 %v882, %v900
        %v905 = vrot.slane %v370, 3
        %v906 = vrot.slane %v371, 3
        %v907 = vsel %vm535, %v905, %v906
        %v909 = vsub.f32 %v872, %v907
        %v910 = vand.u32 2147483647, %v909
        %v912 = vrot.slane %v872, 7
        %v914 = vsub.f32 %v371, %v912
        %v915 = vand.u32 2147483647, %v914
        %v917 = vrot.slane %v915, 1
        %v919 = vadd.f32 %v910, %v917
        %vm920 = vcmp.gt.f32.partialorder %v371, 0.0
        %v922 = vrot.slane %v919, 5
        %v924 = vsel %vm883, %v922, 0.0
        %v925 = vsel %vm920, %v922, 0.0
        %v928 = vrot.slane %v924, 3
        %v929 = vrot.slane %v925, 3
        %v930 = vsel %vm535, %v928, %v929
        %v932 = vadd.f32 %v919, %v930
        %v933 = vmul.f32 %v932, 3.90625e-06
        %v935 = vrot.slane %v933, 5
        %v937 = vadd.f32 %v902, %v935
        %v938 = vadd.f32 %v903, %v935
        %vm941 = vcmask 1040384
        %v942 = vrot.slane %v937, 7
        %v943 = vrot.slane %v938, 7
        %v944 = vsel %vm941, %v942, %v943
        %vm946 = vcmask 1042432
        %v947 = vsel %vm946, %v944, 0.0
        %948 = vadd.xlane.f32.xlu0 %v947
        %v949 = vpop.xlane.xlu0 %948
        %v950 = vrot.slane %v949, 4
        %v951 = vadd.f32 %v949, %v950
        %v952 = vrot.slane %v951, 2
        %v953 = vadd.f32 %v951, %v952
        %v954 = vrot.slane %v953, 1
        %v955 = vadd.f32 %v953, %v954
        %s956 = vtos %v955
        %v957 = vmul.u32 %v519, 128
        %v958 = vlaneseq
        %v959 = vand.u32 %v958, 127
        %v960 = vadd.s32 %v957, %v959
        %vm961 = vcmp.eq.s32.totalorder %v960, 0
        %v962 = vstv %s956
        %v963 = vsel %vm961, %v962, 0.0
        %964 = vst [vmem:[%s365] sm:$0xff] %v963
        %p965 = scmp.lt.s32.totalorder %s20, 1
        %s966 = scalar_select %p965, %s20, 1
        %s967 = smul.addr %s966, 4
        %s968 = scalar_lea.vmem %s7, %s967
        %p969 = scmp.lt.s32.totalorder %s20, 1
        %s970 = scalar_select %p969, %s20, 1
        %s971 = smul.addr %s970, 8
        %s972 = scalar_lea.vmem %s8, %s971
        // Predicated region
        $region90: #{vsr_forward.1} parent=84 // pred_check
          %p973 = pneg %p190
        $region91: #{vsr_forward.1} parent=84 // pred_check_branch
          %975 = sbr.rel (%p973) target = $region93
        $region92: #{vsr_forward.1} parent=84 // pred_region
          _
        $region93: #{vsr_forward.1} parent=84 // pred_fallthru
          _
        // Predicated region
        $region94: #{vsr_forward.1} parent=84 // pred_check
          %p976 = pneg %p216
        $region95: #{vsr_forward.1} parent=84 // pred_check_branch
          %978 = sbr.rel (%p976) target = $region97
        $region96: #{vsr_forward.1} parent=84 // pred_region
          _
        $region97: #{vsr_forward.1} parent=84 // pred_fallthru
          _
      $region85: #{vsr_forward.1} parent=5 // pred_fallthru
        _
      %p979 = scmp.le.s32.totalorder 2, %s15
      // Predicated region
      $region98: #{vsr_forward.1} parent=5 // pred_check
        %p980 = pneg %p979
      $region99: #{vsr_forward.1} parent=5 // pred_check_branch
        %982 = sbr.rel (%p980) target = $region101
      $region100: #{vsr_forward.1} parent=5 // pred_region
        %s983 = ssub.s32 %s15, 2
        // Predicated region
        $region102: #{vsr_forward.1} parent=100 // pred_check
          %p984 = pneg %p196
        $region103: #{vsr_forward.1} parent=100 // pred_check_branch
          %986 = sbr.rel (%p984) target = $region105
        $region104: #{vsr_forward.1} parent=100 // pred_region
          %p987 = scmp.lt.s32.totalorder %s21, 1
          %s988 = scalar_select %p987, %s21, 1
          %s989 = smul.addr %s988, 4
          %s990 = scalar_lea.vmem %s7, %s989
        $region105: #{vsr_forward.1} parent=100 // pred_fallthru
          _
        // Predicated region
        $region106: #{vsr_forward.1} parent=100 // pred_check
          %p991 = pneg %p222
        $region107: #{vsr_forward.1} parent=100 // pred_check_branch
          %993 = sbr.rel (%p991) target = $region109
        $region108: #{vsr_forward.1} parent=100 // pred_region
          %p994 = scmp.lt.s32.totalorder %s21, 1
          %s995 = scalar_select %p994, %s21, 1
          %s996 = smul.addr %s995, 8
          %s997 = scalar_lea.vmem %s8, %s996
        $region109: #{vsr_forward.1} parent=100 // pred_fallthru
          _
      $region101: #{vsr_forward.1} parent=5 // pred_fallthru
        _
    $region6: #{vsr_forward.1} parent=1 // loop_footer
      %s19 = sadd.s32 1, %s15
    $region7: #{vsr_forward.1} parent=1 // loop_footer_branch
      %14 = sbr.rel target = $region3
    $region8: #{vsr_forward.1} parent=1 // loop_exit
      _

</llo_original>
